<compile_context>
chip_gen: v6e
topology: v6e:2x2x1
jax: 0.10.0
libtpu: 0.0.40
codegen_flags: <defaults>
</compile_context>

<pallas_src>
from functools import partial

import jax
import jax.numpy as jnp
from jax.experimental import pallas as pl
from jax.experimental.pallas import tpu as pltpu


def conv1x1_kernel(w_ref, x_ref, o_ref):
    # w_ref: [Cout, Cin]     bf16 (pre-packed weight, resident across grid steps)
    # x_ref: [Cin, tile_m]   bf16 (native-NCHW activation slab, M = H*W)
    # o_ref: [Cout, tile_m]  f32 (default) or bf16
    o_ref[...] = jnp.dot(
        w_ref[...], x_ref[...], preferred_element_type=jnp.float32
    ).astype(o_ref.dtype)


def pack_weight(weight_oihw):
    """One-time (init-time) weight packing: OIHW [Cout, Cin, 1, 1] -> [Cout, Cin] bf16."""
    cout, cin = weight_oihw.shape[0], weight_oihw.shape[1]
    return weight_oihw.reshape(cout, cin).astype(jnp.bfloat16)


def _default_num_m_blocks():
    """2-way spatial split only where there are 2 TensorCores per chip (v7x)."""
    try:
        kind = jax.devices()[0].device_kind.lower()
    except Exception:  # pragma: no cover - defensive, never expected on TPU
        return 1
    return 2 if ("v7" in kind or "7x" in kind) else 1


@partial(jax.jit, static_argnames=("num_m_blocks", "out_dtype"))
def conv2d_1x1(x_nchw, w_packed, *, num_m_blocks=1, out_dtype=jnp.float32):
    """1x1 conv, stride 1, no bias.

    x_nchw:   [1, Cin, H, W] bf16 (upstream emits / stores the layer input as bf16)
    w_packed: [Cout, Cin]    bf16 (init-time packed weight)
    """
    N, C, H, W = x_nchw.shape
    assert N == 1, "kernel specialised for the module's batch size (N=1)"
    Cout = w_packed.shape[0]
    M = H * W

    x2d = x_nchw.reshape(C, M)  # free view: NCHW with N=1 is already [Cin, H*W]
    x2d = x2d.astype(jnp.bfloat16)  # no-op when the producer already emits bf16

    if num_m_blocks <= 1:
        tile_m = M                      # full extent -> legal block even if M % 128 != 0
    else:
        tile_m = 128 * pl.cdiv(pl.cdiv(M, num_m_blocks), 128)
    grid_m = pl.cdiv(M, tile_m)

    out_itemsize = jnp.dtype(out_dtype).itemsize
    flops = 2 * Cout * C * M
    bytes_accessed = (
        C * M * 2                 # activation read (bf16)
        + Cout * C * 2            # packed weight read (bf16)
        + Cout * M * out_itemsize # output write
    )

    out2d = pl.pallas_call(
        conv1x1_kernel,
        out_shape=jax.ShapeDtypeStruct((Cout, M), out_dtype),
        grid=(grid_m,),
        in_specs=[
            pl.BlockSpec((Cout, C), lambda i: (0, 0)),      # weight resident across steps
            pl.BlockSpec((C, tile_m), lambda i: (0, i)),    # spatial slab of X
        ],
        out_specs=pl.BlockSpec((Cout, tile_m), lambda i: (0, i)),
        compiler_params=pltpu.CompilerParams(
            dimension_semantics=("parallel",),              # v7x: split M across TCs
        ),
        cost_estimate=pl.CostEstimate(
            flops=flops, transcendentals=0, bytes_accessed=bytes_accessed
        ),
    )(w_packed, x2d)

    return out2d.reshape(N, Cout, H, W)  # free reshape back to NCHW


if __name__ == "__main__":
    key = jax.random.PRNGKey(0)
    kx, kw = jax.random.split(key)

    # Shapes implied by the module's forward pass.
    N, Cin, H, W = 1, 1056, 14, 14
    Cout = 176

    x_f32 = jax.random.normal(kx, (N, Cin, H, W), dtype=jnp.float32)
    # Deterministic weight init (Conv2d(1056, 176, 1, 1, bias=False)).
    weight = jax.random.normal(kw, (Cout, Cin, 1, 1), dtype=jnp.float32) * 0.02

    # Perf-review item 1: the layer input is stored / produced in bf16 upstream.
    x_bf16 = x_f32.astype(jnp.bfloat16)
    w_packed = pack_weight(weight)  # one-time "init" packing (bf16, [Cout, Cin])

    num_m_blocks = _default_num_m_blocks()
    y = conv2d_1x1(x_bf16, w_packed, num_m_blocks=num_m_blocks)
    y = jax.block_until_ready(y)
    assert y.shape == (N, Cout, H, W), y.shape

    w2d = weight.reshape(Cout, Cin)

    # Tight check against a reference using the same bf16 operands (f32 accumulation):
    ref_bf16 = jnp.einsum(
        "nchw,oc->nohw",
        x_bf16,
        w2d.astype(jnp.bfloat16),
        preferred_element_type=jnp.float32,
    )
    assert jnp.allclose(y, ref_bf16, atol=1e-3, rtol=1e-3)

    # Loose sanity check against the full-precision f32 reference (bf16 rounding, K=1056).
    ref_f32 = jnp.einsum("nchw,oc->nohw", x_f32, w2d)
    assert jnp.allclose(y, ref_f32, atol=5e-2, rtol=5e-2)

    # Also exercise the 2-block (v7x-style) spatial grid path on whatever chip we're on,
    # so both schedules are compile- and correctness-verified.
    y2 = conv2d_1x1(x_bf16, w_packed, num_m_blocks=2)
    y2 = jax.block_until_ready(y2)
    assert jnp.allclose(y2, ref_bf16, atol=1e-3, rtol=1e-3)

    print("KERNEL_OK")
</pallas_src>

<mosaic_0001>
module attributes {stable_mosaic.version = 11 : i64} {
  func.func @conv1x1_kernel(%arg0: i32, %arg1: memref<176x1056xbf16, #tpu.memory_space<vmem>>, %arg2: memref<1056x196xbf16, #tpu.memory_space<vmem>>, %arg3: memref<176x196xf32, #tpu.memory_space<vmem>>) attributes {dimension_semantics = [#tpu.dimension_semantics<parallel>], iteration_bounds = array<i64: 1>, scalar_prefetch = 0 : i64, scratch_operands = 0 : i64, tpu.core_type = #tpu.core_type<tc>, window_params = [{pipeline_mode = #tpu.pipeline_mode<synchronous>, transform_indices = @transform_0, window_bounds = array<i64: 176, 1056>}, {transform_indices = @transform_1, window_bounds = array<i64: 1056, 196>}, {transform_indices = @transform_2, window_bounds = array<i64: 176, 196>}]} {
    %c0 = arith.constant 0 : index
    %c0_0 = arith.constant 0 : index
    %0 = vector.load %arg1[%c0, %c0_0] : memref<176x1056xbf16, #tpu.memory_space<vmem>>, vector<176x1056xbf16>
    %c0_1 = arith.constant 0 : index
    %c0_2 = arith.constant 0 : index
    %1 = vector.load %arg2[%c0_1, %c0_2] : memref<1056x196xbf16, #tpu.memory_space<vmem>>, vector<1056x196xbf16>
    %cst = arith.constant dense<0.000000e+00> : vector<176x196xf32>
    %2 = tpu.matmul %0, %1, %cst {dimension_numbers = #tpu.dot_dimension_numbers<[1], [0], [0], [1], [0, 0, 1, 1], [], []>} : vector<176x1056xbf16>, vector<1056x196xbf16>, vector<176x196xf32> -> vector<176x196xf32>
    %c0_3 = arith.constant 0 : index
    %c0_4 = arith.constant 0 : index
    %3 = vector.load %arg3[%c0_3, %c0_4] : memref<176x196xf32, #tpu.memory_space<vmem>>, vector<176x196xf32>
    tpu.vector_store %arg3[%c0_3, %c0_4], %2 {strides = array<i32>} : memref<176x196xf32, #tpu.memory_space<vmem>>, vector<176x196xf32>,
    return
  }
  func.func @transform_0(%arg0: i32) -> (i32, i32) {
    %c0_i32 = arith.constant 0 : i32
    %c0_i32_0 = arith.constant 0 : i32
    %c0_i32_1 = arith.constant 0 : i32
    return %c0_i32, %c0_i32_0 : i32, i32
  }
  func.func @transform_1(%arg0: i32) -> (i32, i32) {
    %c0_i32 = arith.constant 0 : i32
    %c0_i32_0 = arith.constant 0 : i32
    return %c0_i32, %arg0 : i32, i32
  }
  func.func @transform_2(%arg0: i32) -> (i32, i32) {
    %c0_i32 = arith.constant 0 : i32
    %c0_i32_0 = arith.constant 0 : i32
    return %c0_i32, %arg0 : i32, i32
  }
}

</mosaic_0001>

<llo_original>
// kernel: conv2d_1x1.1
$region0: #{conv2d_1x1.1}
  #allocation0 [shape = 'u32[]', space=smem, size = 0x4, offset = 0x4, fixed_abs, tag = 'smem constant byte address 0x4 - core index']
  #allocation1 [shape = 'u32[144,128]{1,0:T(1,128)}', space=vmem, size = 0x12000, scoped, tag = 'internal scratch']
  %s0 = inlined_call_operand.vmem [shape: bf16[176,1056], index: 0, kind: input, shape index: {}]
  %s1 = inlined_call_operand.vmem [shape: bf16[1056,196], index: 1, kind: input, shape index: {}]
  %s2 = inlined_call_operand.vmem [shape: f32[176,196], index: 2, kind: output, shape index: {}]
  %s3 = sld [smem:[#allocation0]]
  $region18: #{conv2d_1x1.1} parent=0
    _
  %s5 = ssub.s32 1, %s3
  %s6 = scalar_select 0, %s5, %s3
  // Predicated region
  $region2: #{conv2d_1x1.1} parent=0 // pred_check
    _
  $region3: #{conv2d_1x1.1} parent=0 // pred_check_branch
    %8 = sbr.rel (0) target = $region5
  $region4: #{conv2d_1x1.1} parent=0 // pred_region
    _
  $region5: #{conv2d_1x1.1} parent=0 // pred_fallthru
    _
  // Predicated region
  $region6: #{conv2d_1x1.1} parent=0 // pred_check
    _
  $region7: #{conv2d_1x1.1} parent=0 // pred_check_branch
    %10 = sbr.rel (0) target = $region9
  $region8: #{conv2d_1x1.1} parent=0 // pred_region
    _
  $region9: #{conv2d_1x1.1} parent=0 // pred_fallthru
    _
  %v12 = vld [vmem:[%s0] sm:$0xff]
  %v13 = vld [vmem:[%s0 + $0x8] sm:$0xff]
  %v14 = vld [vmem:[%s0 + $0x10] sm:$0xff]
  %v15 = vld [vmem:[%s0 + $0x18] sm:$0xff]
  %v16 = vld [vmem:[%s0 + $0x20] sm:$0xf]
  %v17 = vld [vmem:[%s0 + $0x24] sm:$0xff]
  %v18 = vld [vmem:[%s0 + $0x2c] sm:$0xff]
  %v19 = vld [vmem:[%s0 + $0x34] sm:$0xff]
  %v20 = vld [vmem:[%s0 + $0x3c] sm:$0xff]
  %v21 = vld [vmem:[%s0 + $0x44] sm:$0xf]
  %v22 = vld [vmem:[%s0 + $0x48] sm:$0xff]
  %v23 = vld [vmem:[%s0 + $0x50] sm:$0xff]
  %v24 = vld [vmem:[%s0 + $0x58] sm:$0xff]
  %v25 = vld [vmem:[%s0 + $0x60] sm:$0xff]
  %v26 = vld [vmem:[%s0 + $0x68] sm:$0xf]
  %v27 = vld [vmem:[%s0 + $0x6c] sm:$0xff]
  %v28 = vld [vmem:[%s0 + $0x74] sm:$0xff]
  %v29 = vld [vmem:[%s0 + $0x7c] sm:$0xff]
  %v30 = vld [vmem:[%s0 + $0x84] sm:$0xff]
  %v31 = vld [vmem:[%s0 + $0x8c] sm:$0xf]
  %v32 = vld [vmem:[%s0 + $0x90] sm:$0xff]
  %v33 = vld [vmem:[%s0 + $0x98] sm:$0xff]
  %v34 = vld [vmem:[%s0 + $0xa0] sm:$0xff]
  %v35 = vld [vmem:[%s0 + $0xa8] sm:$0xff]
  %v36 = vld [vmem:[%s0 + $0xb0] sm:$0xf]
  %v37 = vld [vmem:[%s0 + $0xb4] sm:$0xff]
  %v38 = vld [vmem:[%s0 + $0xbc] sm:$0xff]
  %v39 = vld [vmem:[%s0 + $0xc4] sm:$0xff]
  %v40 = vld [vmem:[%s0 + $0xcc] sm:$0xff]
  %v41 = vld [vmem:[%s0 + $0xd4] sm:$0xf]
  %v42 = vld [vmem:[%s0 + $0xd8] sm:$0xff]
  %v43 = vld [vmem:[%s0 + $0xe0] sm:$0xff]
  %v44 = vld [vmem:[%s0 + $0xe8] sm:$0xff]
  %v45 = vld [vmem:[%s0 + $0xf0] sm:$0xff]
  %v46 = vld [vmem:[%s0 + $0xf8] sm:$0xf]
  %v47 = vld [vmem:[%s0 + $0xfc] sm:$0xff]
  %v48 = vld [vmem:[%s0 + $0x104] sm:$0xff]
  %v49 = vld [vmem:[%s0 + $0x10c] sm:$0xff]
  %v50 = vld [vmem:[%s0 + $0x114] sm:$0xff]
  %v51 = vld [vmem:[%s0 + $0x11c] sm:$0xf]
  %v52 = vld [vmem:[%s0 + $0x120] sm:$0xff]
  %v53 = vld [vmem:[%s0 + $0x128] sm:$0xff]
  %v54 = vld [vmem:[%s0 + $0x130] sm:$0xff]
  %v55 = vld [vmem:[%s0 + $0x138] sm:$0xff]
  %v56 = vld [vmem:[%s0 + $0x140] sm:$0xf]
  %v57 = vld [vmem:[%s0 + $0x144] sm:$0xff]
  %v58 = vld [vmem:[%s0 + $0x14c] sm:$0xff]
  %v59 = vld [vmem:[%s0 + $0x154] sm:$0xff]
  %v60 = vld [vmem:[%s0 + $0x15c] sm:$0xff]
  %v61 = vld [vmem:[%s0 + $0x164] sm:$0xf]
  %v62 = vld [vmem:[%s0 + $0x168] sm:$0xff]
  %v63 = vld [vmem:[%s0 + $0x170] sm:$0xff]
  %v64 = vld [vmem:[%s0 + $0x178] sm:$0xff]
  %v65 = vld [vmem:[%s0 + $0x180] sm:$0xff]
  %v66 = vld [vmem:[%s0 + $0x188] sm:$0xf]
  %v67 = vld [vmem:[%s0 + $0x18c] sm:$0xff]
  %v68 = vld [vmem:[%s0 + $0x194] sm:$0xff]
  %v69 = vld [vmem:[%s0 + $0x19c] sm:$0xff]
  %v70 = vld [vmem:[%s0 + $0x1a4] sm:$0xff]
  %v71 = vld [vmem:[%s0 + $0x1ac] sm:$0xf]
  %v72 = vld [vmem:[%s0 + $0x1b0] sm:$0xff]
  %v73 = vld [vmem:[%s0 + $0x1b8] sm:$0xff]
  %v74 = vld [vmem:[%s0 + $0x1c0] sm:$0xff]
  %v75 = vld [vmem:[%s0 + $0x1c8] sm:$0xff]
  %v76 = vld [vmem:[%s0 + $0x1d0] sm:$0xf]
  %v77 = vld [vmem:[%s0 + $0x1d4] sm:$0xff]
  %v78 = vld [vmem:[%s0 + $0x1dc] sm:$0xff]
  %v79 = vld [vmem:[%s0 + $0x1e4] sm:$0xff]
  %v80 = vld [vmem:[%s0 + $0x1ec] sm:$0xff]
  %v81 = vld [vmem:[%s0 + $0x1f4] sm:$0xf]
  %v82 = vld [vmem:[%s0 + $0x1f8] sm:$0xff]
  %v83 = vld [vmem:[%s0 + $0x200] sm:$0xff]
  %v84 = vld [vmem:[%s0 + $0x208] sm:$0xff]
  %v85 = vld [vmem:[%s0 + $0x210] sm:$0xff]
  %v86 = vld [vmem:[%s0 + $0x218] sm:$0xf]
  %v87 = vld [vmem:[%s0 + $0x21c] sm:$0xff]
  %v88 = vld [vmem:[%s0 + $0x224] sm:$0xff]
  %v89 = vld [vmem:[%s0 + $0x22c] sm:$0xff]
  %v90 = vld [vmem:[%s0 + $0x234] sm:$0xff]
  %v91 = vld [vmem:[%s0 + $0x23c] sm:$0xf]
  %v92 = vld [vmem:[%s0 + $0x240] sm:$0xff]
  %v93 = vld [vmem:[%s0 + $0x248] sm:$0xff]
  %v94 = vld [vmem:[%s0 + $0x250] sm:$0xff]
  %v95 = vld [vmem:[%s0 + $0x258] sm:$0xff]
  %v96 = vld [vmem:[%s0 + $0x260] sm:$0xf]
  %v97 = vld [vmem:[%s0 + $0x264] sm:$0xff]
  %v98 = vld [vmem:[%s0 + $0x26c] sm:$0xff]
  %v99 = vld [vmem:[%s0 + $0x274] sm:$0xff]
  %v100 = vld [vmem:[%s0 + $0x27c] sm:$0xff]
  %v101 = vld [vmem:[%s0 + $0x284] sm:$0xf]
  %v102 = vld [vmem:[%s0 + $0x288] sm:$0xff]
  %v103 = vld [vmem:[%s0 + $0x290] sm:$0xff]
  %v104 = vld [vmem:[%s0 + $0x298] sm:$0xff]
  %v105 = vld [vmem:[%s0 + $0x2a0] sm:$0xff]
  %v106 = vld [vmem:[%s0 + $0x2a8] sm:$0xf]
  %v107 = vld [vmem:[%s0 + $0x2ac] sm:$0xff]
  %v108 = vld [vmem:[%s0 + $0x2b4] sm:$0xff]
  %v109 = vld [vmem:[%s0 + $0x2bc] sm:$0xff]
  %v110 = vld [vmem:[%s0 + $0x2c4] sm:$0xff]
  %v111 = vld [vmem:[%s0 + $0x2cc] sm:$0xf]
  %v112 = vld [vmem:[%s0 + $0x2d0] sm:$0xff]
  %v113 = vld [vmem:[%s0 + $0x2d8] sm:$0xff]
  %v114 = vld [vmem:[%s0 + $0x2e0] sm:$0xff]
  %v115 = vld [vmem:[%s0 + $0x2e8] sm:$0xff]
  %v116 = vld [vmem:[%s0 + $0x2f0] sm:$0xf]
  %v117 = vld [vmem:[%s0 + $0x2f4] sm:$0xff]
  %v118 = vld [vmem:[%s0 + $0x2fc] sm:$0xff]
  %v119 = vld [vmem:[%s0 + $0x304] sm:$0xff]
  %v120 = vld [vmem:[%s0 + $0x30c] sm:$0xff]
  %v121 = vld [vmem:[%s0 + $0x314] sm:$0xf]
  %v122 = vld [vmem:[%s1] sm:$0xff]
  %v123 = vld [vmem:[%s1 + $0x8] sm:$0xff]
  %v124 = vld [vmem:[%s1 + $0x10] sm:$0xff]
  %v125 = vld [vmem:[%s1 + $0x18] sm:$0xff]
  %v126 = vld [vmem:[%s1 + $0x20] sm:$0xff]
  %v127 = vld [vmem:[%s1 + $0x28] sm:$0xff]
  %v128 = vld [vmem:[%s1 + $0x30] sm:$0xff]
  %v129 = vld [vmem:[%s1 + $0x38] sm:$0xff]
  %v130 = vld [vmem:[%s1 + $0x40] sm:$0xff]
  %v131 = vld [vmem:[%s1 + $0x48] sm:$0xff]
  %v132 = vld [vmem:[%s1 + $0x50] sm:$0xff]
  %v133 = vld [vmem:[%s1 + $0x58] sm:$0xff]
  %v134 = vld [vmem:[%s1 + $0x60] sm:$0xff]
  %v135 = vld [vmem:[%s1 + $0x68] sm:$0xff]
  %v136 = vld [vmem:[%s1 + $0x70] sm:$0xff]
  %v137 = vld [vmem:[%s1 + $0x78] sm:$0xff]
  %v138 = vld [vmem:[%s1 + $0x80] sm:$0xff]
  %v139 = vld [vmem:[%s1 + $0x88] sm:$0xff]
  %v140 = vld [vmem:[%s1 + $0x90] sm:$0xff]
  %v141 = vld [vmem:[%s1 + $0x98] sm:$0xff]
  %v142 = vld [vmem:[%s1 + $0xa0] sm:$0xff]
  %v143 = vld [vmem:[%s1 + $0xa8] sm:$0xff]
  %v144 = vld [vmem:[%s1 + $0xb0] sm:$0xff]
  %v145 = vld [vmem:[%s1 + $0xb8] sm:$0xff]
  %v146 = vld [vmem:[%s1 + $0xc0] sm:$0xff]
  %v147 = vld [vmem:[%s1 + $0xc8] sm:$0xff]
  %v148 = vld [vmem:[%s1 + $0xd0] sm:$0xff]
  %v149 = vld [vmem:[%s1 + $0xd8] sm:$0xff]
  %v150 = vld [vmem:[%s1 + $0xe0] sm:$0xff]
  %v151 = vld [vmem:[%s1 + $0xe8] sm:$0xff]
  %v152 = vld [vmem:[%s1 + $0xf0] sm:$0xff]
  %v153 = vld [vmem:[%s1 + $0xf8] sm:$0xff]
  %v154 = vld [vmem:[%s1 + $0x100] sm:$0xff]
  %v155 = vld [vmem:[%s1 + $0x108] sm:$0xff]
  %v156 = vld [vmem:[%s1 + $0x110] sm:$0xff]
  %v157 = vld [vmem:[%s1 + $0x118] sm:$0xff]
  %v158 = vld [vmem:[%s1 + $0x120] sm:$0xff]
  %v159 = vld [vmem:[%s1 + $0x128] sm:$0xff]
  %v160 = vld [vmem:[%s1 + $0x130] sm:$0xff]
  %v161 = vld [vmem:[%s1 + $0x138] sm:$0xff]
  %v162 = vld [vmem:[%s1 + $0x140] sm:$0xff]
  %v163 = vld [vmem:[%s1 + $0x148] sm:$0xff]
  %v164 = vld [vmem:[%s1 + $0x150] sm:$0xff]
  %v165 = vld [vmem:[%s1 + $0x158] sm:$0xff]
  %v166 = vld [vmem:[%s1 + $0x160] sm:$0xff]
  %v167 = vld [vmem:[%s1 + $0x168] sm:$0xff]
  %v168 = vld [vmem:[%s1 + $0x170] sm:$0xff]
  %v169 = vld [vmem:[%s1 + $0x178] sm:$0xff]
  %v170 = vld [vmem:[%s1 + $0x180] sm:$0xff]
  %v171 = vld [vmem:[%s1 + $0x188] sm:$0xff]
  %v172 = vld [vmem:[%s1 + $0x190] sm:$0xff]
  %v173 = vld [vmem:[%s1 + $0x198] sm:$0xff]
  %v174 = vld [vmem:[%s1 + $0x1a0] sm:$0xff]
  %v175 = vld [vmem:[%s1 + $0x1a8] sm:$0xff]
  %v176 = vld [vmem:[%s1 + $0x1b0] sm:$0xff]
  %v177 = vld [vmem:[%s1 + $0x1b8] sm:$0xff]
  %v178 = vld [vmem:[%s1 + $0x1c0] sm:$0xff]
  %v179 = vld [vmem:[%s1 + $0x1c8] sm:$0xff]
  %v180 = vld [vmem:[%s1 + $0x1d0] sm:$0xff]
  %v181 = vld [vmem:[%s1 + $0x1d8] sm:$0xff]
  %v182 = vld [vmem:[%s1 + $0x1e0] sm:$0xff]
  %v183 = vld [vmem:[%s1 + $0x1e8] sm:$0xff]
  %v184 = vld [vmem:[%s1 + $0x1f0] sm:$0xff]
  %v185 = vld [vmem:[%s1 + $0x1f8] sm:$0xff]
  %v186 = vld [vmem:[%s1 + $0x200] sm:$0xff]
  %v187 = vld [vmem:[%s1 + $0x208] sm:$0xff]
  %v188 = vld [vmem:[%s1 + $0x210] sm:$0xff]
  %v189 = vld [vmem:[%s1 + $0x218] sm:$0xff]
  %v190 = vld [vmem:[%s1 + $0x220] sm:$0xff]
  %v191 = vld [vmem:[%s1 + $0x228] sm:$0xff]
  %v192 = vld [vmem:[%s1 + $0x230] sm:$0xff]
  %v193 = vld [vmem:[%s1 + $0x238] sm:$0xff]
  %v194 = vld [vmem:[%s1 + $0x240] sm:$0xff]
  %v195 = vld [vmem:[%s1 + $0x248] sm:$0xff]
  %v196 = vld [vmem:[%s1 + $0x250] sm:$0xff]
  %v197 = vld [vmem:[%s1 + $0x258] sm:$0xff]
  %v198 = vld [vmem:[%s1 + $0x260] sm:$0xff]
  %v199 = vld [vmem:[%s1 + $0x268] sm:$0xff]
  %v200 = vld [vmem:[%s1 + $0x270] sm:$0xff]
  %v201 = vld [vmem:[%s1 + $0x278] sm:$0xff]
  %v202 = vld [vmem:[%s1 + $0x280] sm:$0xff]
  %v203 = vld [vmem:[%s1 + $0x288] sm:$0xff]
  %v204 = vld [vmem:[%s1 + $0x290] sm:$0xff]
  %v205 = vld [vmem:[%s1 + $0x298] sm:$0xff]
  %v206 = vld [vmem:[%s1 + $0x2a0] sm:$0xff]
  %v207 = vld [vmem:[%s1 + $0x2a8] sm:$0xff]
  %v208 = vld [vmem:[%s1 + $0x2b0] sm:$0xff]
  %v209 = vld [vmem:[%s1 + $0x2b8] sm:$0xff]
  %v210 = vld [vmem:[%s1 + $0x2c0] sm:$0xff]
  %v211 = vld [vmem:[%s1 + $0x2c8] sm:$0xff]
  %v212 = vld [vmem:[%s1 + $0x2d0] sm:$0xff]
  %v213 = vld [vmem:[%s1 + $0x2d8] sm:$0xff]
  %v214 = vld [vmem:[%s1 + $0x2e0] sm:$0xff]
  %v215 = vld [vmem:[%s1 + $0x2e8] sm:$0xff]
  %v216 = vld [vmem:[%s1 + $0x2f0] sm:$0xff]
  %v217 = vld [vmem:[%s1 + $0x2f8] sm:$0xff]
  %v218 = vld [vmem:[%s1 + $0x300] sm:$0xff]
  %v219 = vld [vmem:[%s1 + $0x308] sm:$0xff]
  %v220 = vld [vmem:[%s1 + $0x310] sm:$0xff]
  %v221 = vld [vmem:[%s1 + $0x318] sm:$0xff]
  %v222 = vld [vmem:[%s1 + $0x320] sm:$0xff]
  %v223 = vld [vmem:[%s1 + $0x328] sm:$0xff]
  %v224 = vld [vmem:[%s1 + $0x330] sm:$0xff]
  %v225 = vld [vmem:[%s1 + $0x338] sm:$0xff]
  %v226 = vld [vmem:[%s1 + $0x340] sm:$0xff]
  %v227 = vld [vmem:[%s1 + $0x348] sm:$0xff]
  %v228 = vld [vmem:[%s1 + $0x350] sm:$0xff]
  %v229 = vld [vmem:[%s1 + $0x358] sm:$0xff]
  %v230 = vld [vmem:[%s1 + $0x360] sm:$0xff]
  %v231 = vld [vmem:[%s1 + $0x368] sm:$0xff]
  %v232 = vld [vmem:[%s1 + $0x370] sm:$0xff]
  %v233 = vld [vmem:[%s1 + $0x378] sm:$0xff]
  %v234 = vld [vmem:[%s1 + $0x380] sm:$0xff]
  %v235 = vld [vmem:[%s1 + $0x388] sm:$0xff]
  %v236 = vld [vmem:[%s1 + $0x390] sm:$0xff]
  %v237 = vld [vmem:[%s1 + $0x398] sm:$0xff]
  %v238 = vld [vmem:[%s1 + $0x3a0] sm:$0xff]
  %v239 = vld [vmem:[%s1 + $0x3a8] sm:$0xff]
  %v240 = vld [vmem:[%s1 + $0x3b0] sm:$0xff]
  %v241 = vld [vmem:[%s1 + $0x3b8] sm:$0xff]
  %v242 = vld [vmem:[%s1 + $0x3c0] sm:$0xff]
  %v243 = vld [vmem:[%s1 + $0x3c8] sm:$0xff]
  %v244 = vld [vmem:[%s1 + $0x3d0] sm:$0xff]
  %v245 = vld [vmem:[%s1 + $0x3d8] sm:$0xff]
  %v246 = vld [vmem:[%s1 + $0x3e0] sm:$0xff]
  %v247 = vld [vmem:[%s1 + $0x3e8] sm:$0xff]
  %v248 = vld [vmem:[%s1 + $0x3f0] sm:$0xff]
  %v249 = vld [vmem:[%s1 + $0x3f8] sm:$0xff]
  %v250 = vld [vmem:[%s1 + $0x400] sm:$0xff]
  %v251 = vld [vmem:[%s1 + $0x408] sm:$0xff]
  %v252 = vld [vmem:[%s1 + $0x410] sm:$0xff]
  %v253 = vld [vmem:[%s1 + $0x418] sm:$0xff]
  %v364 = vunpack.c.l.b16 %v12
  %v365 = vunpack.c.h.b16 %v12
  %v366 = vunpack.c.l.b16 %v13
  %v367 = vunpack.c.h.b16 %v13
  %v368 = vunpack.c.l.b16 %v14
  %v369 = vunpack.c.h.b16 %v14
  %v370 = vunpack.c.l.b16 %v15
  %v371 = vunpack.c.h.b16 %v15
  %v372 = vunpack.c.l.b16 %v16
  %v373 = vunpack.c.l.b16 %v17
  %v374 = vunpack.c.h.b16 %v17
  %v375 = vunpack.c.l.b16 %v18
  %v376 = vunpack.c.h.b16 %v18
  %v377 = vunpack.c.l.b16 %v19
  %v378 = vunpack.c.h.b16 %v19
  %v379 = vunpack.c.l.b16 %v20
  %v380 = vunpack.c.h.b16 %v20
  %v381 = vunpack.c.l.b16 %v21
  %v382 = vunpack.c.l.b16 %v22
  %v383 = vunpack.c.h.b16 %v22
  %v384 = vunpack.c.l.b16 %v23
  %v385 = vunpack.c.h.b16 %v23
  %v386 = vunpack.c.l.b16 %v24
  %v387 = vunpack.c.h.b16 %v24
  %v388 = vunpack.c.l.b16 %v25
  %v389 = vunpack.c.h.b16 %v25
  %v390 = vunpack.c.l.b16 %v26
  %v391 = vunpack.c.l.b16 %v27
  %v392 = vunpack.c.h.b16 %v27
  %v393 = vunpack.c.l.b16 %v28
  %v394 = vunpack.c.h.b16 %v28
  %v395 = vunpack.c.l.b16 %v29
  %v396 = vunpack.c.h.b16 %v29
  %v397 = vunpack.c.l.b16 %v30
  %v398 = vunpack.c.h.b16 %v30
  %v399 = vunpack.c.l.b16 %v31
  %v400 = vunpack.c.l.b16 %v32
  %v401 = vunpack.c.h.b16 %v32
  %v402 = vunpack.c.l.b16 %v33
  %v403 = vunpack.c.h.b16 %v33
  %v404 = vunpack.c.l.b16 %v34
  %v405 = vunpack.c.h.b16 %v34
  %v406 = vunpack.c.l.b16 %v35
  %v407 = vunpack.c.h.b16 %v35
  %v408 = vunpack.c.l.b16 %v36
  %v409 = vunpack.c.l.b16 %v37
  %v410 = vunpack.c.h.b16 %v37
  %v411 = vunpack.c.l.b16 %v38
  %v412 = vunpack.c.h.b16 %v38
  %v413 = vunpack.c.l.b16 %v39
  %v414 = vunpack.c.h.b16 %v39
  %v415 = vunpack.c.l.b16 %v40
  %v416 = vunpack.c.h.b16 %v40
  %v417 = vunpack.c.l.b16 %v41
  %v418 = vunpack.c.l.b16 %v42
  %v419 = vunpack.c.h.b16 %v42
  %v420 = vunpack.c.l.b16 %v43
  %v421 = vunpack.c.h.b16 %v43
  %v422 = vunpack.c.l.b16 %v44
  %v423 = vunpack.c.h.b16 %v44
  %v424 = vunpack.c.l.b16 %v45
  %v425 = vunpack.c.h.b16 %v45
  %v426 = vunpack.c.l.b16 %v46
  %v427 = vunpack.c.l.b16 %v47
  %v428 = vunpack.c.h.b16 %v47
  %v429 = vunpack.c.l.b16 %v48
  %v430 = vunpack.c.h.b16 %v48
  %v431 = vunpack.c.l.b16 %v49
  %v432 = vunpack.c.h.b16 %v49
  %v433 = vunpack.c.l.b16 %v50
  %v434 = vunpack.c.h.b16 %v50
  %v435 = vunpack.c.l.b16 %v51
  %v436 = vunpack.c.l.b16 %v52
  %v437 = vunpack.c.h.b16 %v52
  %v438 = vunpack.c.l.b16 %v53
  %v439 = vunpack.c.h.b16 %v53
  %v440 = vunpack.c.l.b16 %v54
  %v441 = vunpack.c.h.b16 %v54
  %v442 = vunpack.c.l.b16 %v55
  %v443 = vunpack.c.h.b16 %v55
  %v444 = vunpack.c.l.b16 %v56
  %v445 = vunpack.c.l.b16 %v57
  %v446 = vunpack.c.h.b16 %v57
  %v447 = vunpack.c.l.b16 %v58
  %v448 = vunpack.c.h.b16 %v58
  %v449 = vunpack.c.l.b16 %v59
  %v450 = vunpack.c.h.b16 %v59
  %v451 = vunpack.c.l.b16 %v60
  %v452 = vunpack.c.h.b16 %v60
  %v453 = vunpack.c.l.b16 %v61
  %v454 = vunpack.c.l.b16 %v62
  %v455 = vunpack.c.h.b16 %v62
  %v456 = vunpack.c.l.b16 %v63
  %v457 = vunpack.c.h.b16 %v63
  %v458 = vunpack.c.l.b16 %v64
  %v459 = vunpack.c.h.b16 %v64
  %v460 = vunpack.c.l.b16 %v65
  %v461 = vunpack.c.h.b16 %v65
  %v462 = vunpack.c.l.b16 %v66
  %v463 = vunpack.c.l.b16 %v67
  %v464 = vunpack.c.h.b16 %v67
  %v465 = vunpack.c.l.b16 %v68
  %v466 = vunpack.c.h.b16 %v68
  %v467 = vunpack.c.l.b16 %v69
  %v468 = vunpack.c.h.b16 %v69
  %v469 = vunpack.c.l.b16 %v70
  %v470 = vunpack.c.h.b16 %v70
  %v471 = vunpack.c.l.b16 %v71
  %v472 = vunpack.c.l.b16 %v72
  %v473 = vunpack.c.h.b16 %v72
  %v474 = vunpack.c.l.b16 %v73
  %v475 = vunpack.c.h.b16 %v73
  %v476 = vunpack.c.l.b16 %v74
  %v477 = vunpack.c.h.b16 %v74
  %v478 = vunpack.c.l.b16 %v75
  %v479 = vunpack.c.h.b16 %v75
  %v480 = vunpack.c.l.b16 %v76
  %v481 = vunpack.c.l.b16 %v77
  %v482 = vunpack.c.h.b16 %v77
  %v483 = vunpack.c.l.b16 %v78
  %v484 = vunpack.c.h.b16 %v78
  %v485 = vunpack.c.l.b16 %v79
  %v486 = vunpack.c.h.b16 %v79
  %v487 = vunpack.c.l.b16 %v80
  %v488 = vunpack.c.h.b16 %v80
  %v489 = vunpack.c.l.b16 %v81
  %v490 = vunpack.c.l.b16 %v82
  %v491 = vunpack.c.h.b16 %v82
  %v492 = vunpack.c.l.b16 %v83
  %v493 = vunpack.c.h.b16 %v83
  %v494 = vunpack.c.l.b16 %v84
  %v495 = vunpack.c.h.b16 %v84
  %v496 = vunpack.c.l.b16 %v85
  %v497 = vunpack.c.h.b16 %v85
  %v498 = vunpack.c.l.b16 %v86
  %v499 = vunpack.c.l.b16 %v87
  %v500 = vunpack.c.h.b16 %v87
  %v501 = vunpack.c.l.b16 %v88
  %v502 = vunpack.c.h.b16 %v88
  %v503 = vunpack.c.l.b16 %v89
  %v504 = vunpack.c.h.b16 %v89
  %v505 = vunpack.c.l.b16 %v90
  %v506 = vunpack.c.h.b16 %v90
  %v507 = vunpack.c.l.b16 %v91
  %v508 = vunpack.c.l.b16 %v92
  %v509 = vunpack.c.h.b16 %v92
  %v510 = vunpack.c.l.b16 %v93
  %v511 = vunpack.c.h.b16 %v93
  %v512 = vunpack.c.l.b16 %v94
  %v513 = vunpack.c.h.b16 %v94
  %v514 = vunpack.c.l.b16 %v95
  %v515 = vunpack.c.h.b16 %v95
  %v516 = vunpack.c.l.b16 %v96
  %v517 = vunpack.c.l.b16 %v97
  %v518 = vunpack.c.h.b16 %v97
  %v519 = vunpack.c.l.b16 %v98
  %v520 = vunpack.c.h.b16 %v98
  %v521 = vunpack.c.l.b16 %v99
  %v522 = vunpack.c.h.b16 %v99
  %v523 = vunpack.c.l.b16 %v100
  %v524 = vunpack.c.h.b16 %v100
  %v525 = vunpack.c.l.b16 %v101
  %v526 = vunpack.c.l.b16 %v102
  %v527 = vunpack.c.h.b16 %v102
  %v528 = vunpack.c.l.b16 %v103
  %v529 = vunpack.c.h.b16 %v103
  %v530 = vunpack.c.l.b16 %v104
  %v531 = vunpack.c.h.b16 %v104
  %v532 = vunpack.c.l.b16 %v105
  %v533 = vunpack.c.h.b16 %v105
  %v534 = vunpack.c.l.b16 %v106
  %v535 = vunpack.c.l.b16 %v107
  %v536 = vunpack.c.h.b16 %v107
  %v537 = vunpack.c.l.b16 %v108
  %v538 = vunpack.c.h.b16 %v108
  %v539 = vunpack.c.l.b16 %v109
  %v540 = vunpack.c.h.b16 %v109
  %v541 = vunpack.c.l.b16 %v110
  %v542 = vunpack.c.h.b16 %v110
  %v543 = vunpack.c.l.b16 %v111
  %v544 = vunpack.c.l.b16 %v112
  %v545 = vunpack.c.h.b16 %v112
  %v546 = vunpack.c.l.b16 %v113
  %v547 = vunpack.c.h.b16 %v113
  %v548 = vunpack.c.l.b16 %v114
  %v549 = vunpack.c.h.b16 %v114
  %v550 = vunpack.c.l.b16 %v115
  %v551 = vunpack.c.h.b16 %v115
  %v552 = vunpack.c.l.b16 %v116
  %v553 = vunpack.c.l.b16 %v117
  %v554 = vunpack.c.h.b16 %v117
  %v555 = vunpack.c.l.b16 %v118
  %v556 = vunpack.c.h.b16 %v118
  %v557 = vunpack.c.l.b16 %v119
  %v558 = vunpack.c.h.b16 %v119
  %v559 = vunpack.c.l.b16 %v120
  %v560 = vunpack.c.h.b16 %v120
  %v561 = vunpack.c.l.b16 %v121
  %v562 = vpack.c.b16 %v373, %v364
  %v563 = vpack.c.b16 %v374, %v365
  %v564 = vpack.c.b16 %v375, %v366
  %v565 = vpack.c.b16 %v376, %v367
  %v566 = vpack.c.b16 %v377, %v368
  %v567 = vpack.c.b16 %v378, %v369
  %v568 = vpack.c.b16 %v379, %v370
  %v569 = vpack.c.b16 %v380, %v371
  %v570 = vpack.c.b16 %v381, %v372
  %v571 = vpack.c.b16 %v391, %v382
  %v572 = vpack.c.b16 %v392, %v383
  %v573 = vpack.c.b16 %v393, %v384
  %v574 = vpack.c.b16 %v394, %v385
  %v575 = vpack.c.b16 %v395, %v386
  %v576 = vpack.c.b16 %v396, %v387
  %v577 = vpack.c.b16 %v397, %v388
  %v578 = vpack.c.b16 %v398, %v389
  %v579 = vpack.c.b16 %v399, %v390
  %v580 = vpack.c.b16 %v409, %v400
  %v581 = vpack.c.b16 %v410, %v401
  %v582 = vpack.c.b16 %v411, %v402
  %v583 = vpack.c.b16 %v412, %v403
  %v584 = vpack.c.b16 %v413, %v404
  %v585 = vpack.c.b16 %v414, %v405
  %v586 = vpack.c.b16 %v415, %v406
  %v587 = vpack.c.b16 %v416, %v407
  %v588 = vpack.c.b16 %v417, %v408
  %v589 = vpack.c.b16 %v427, %v418
  %v590 = vpack.c.b16 %v428, %v419
  %v591 = vpack.c.b16 %v429, %v420
  %v592 = vpack.c.b16 %v430, %v421
  %v593 = vpack.c.b16 %v431, %v422
  %v594 = vpack.c.b16 %v432, %v423
  %v595 = vpack.c.b16 %v433, %v424
  %v596 = vpack.c.b16 %v434, %v425
  %v597 = vpack.c.b16 %v435, %v426
  %v598 = vpack.c.b16 %v445, %v436
  %v599 = vpack.c.b16 %v446, %v437
  %v600 = vpack.c.b16 %v447, %v438
  %v601 = vpack.c.b16 %v448, %v439
  %v602 = vpack.c.b16 %v449, %v440
  %v603 = vpack.c.b16 %v450, %v441
  %v604 = vpack.c.b16 %v451, %v442
  %v605 = vpack.c.b16 %v452, %v443
  %v606 = vpack.c.b16 %v453, %v444
  %v607 = vpack.c.b16 %v463, %v454
  %v608 = vpack.c.b16 %v464, %v455
  %v609 = vpack.c.b16 %v465, %v456
  %v610 = vpack.c.b16 %v466, %v457
  %v611 = vpack.c.b16 %v467, %v458
  %v612 = vpack.c.b16 %v468, %v459
  %v613 = vpack.c.b16 %v469, %v460
  %v614 = vpack.c.b16 %v470, %v461
  %v615 = vpack.c.b16 %v471, %v462
  %v616 = vpack.c.b16 %v481, %v472
  %v617 = vpack.c.b16 %v482, %v473
  %v618 = vpack.c.b16 %v483, %v474
  %v619 = vpack.c.b16 %v484, %v475
  %v620 = vpack.c.b16 %v485, %v476
  %v621 = vpack.c.b16 %v486, %v477
  %v622 = vpack.c.b16 %v487, %v478
  %v623 = vpack.c.b16 %v488, %v479
  %v624 = vpack.c.b16 %v489, %v480
  %v625 = vpack.c.b16 %v499, %v490
  %v626 = vpack.c.b16 %v500, %v491
  %v627 = vpack.c.b16 %v501, %v492
  %v628 = vpack.c.b16 %v502, %v493
  %v629 = vpack.c.b16 %v503, %v494
  %v630 = vpack.c.b16 %v504, %v495
  %v631 = vpack.c.b16 %v505, %v496
  %v632 = vpack.c.b16 %v506, %v497
  %v633 = vpack.c.b16 %v507, %v498
  %v634 = vpack.c.b16 %v517, %v508
  %v635 = vpack.c.b16 %v518, %v509
  %v636 = vpack.c.b16 %v519, %v510
  %v637 = vpack.c.b16 %v520, %v511
  %v638 = vpack.c.b16 %v521, %v512
  %v639 = vpack.c.b16 %v522, %v513
  %v640 = vpack.c.b16 %v523, %v514
  %v641 = vpack.c.b16 %v524, %v515
  %v642 = vpack.c.b16 %v525, %v516
  %v643 = vpack.c.b16 %v535, %v526
  %v644 = vpack.c.b16 %v536, %v527
  %v645 = vpack.c.b16 %v537, %v528
  %v646 = vpack.c.b16 %v538, %v529
  %v647 = vpack.c.b16 %v539, %v530
  %v648 = vpack.c.b16 %v540, %v531
  %v649 = vpack.c.b16 %v541, %v532
  %v650 = vpack.c.b16 %v542, %v533
  %v651 = vpack.c.b16 %v543, %v534
  %v652 = vpack.c.b16 %v553, %v544
  %v653 = vpack.c.b16 %v554, %v545
  %v654 = vpack.c.b16 %v555, %v546
  %v655 = vpack.c.b16 %v556, %v547
  %v656 = vpack.c.b16 %v557, %v548
  %v657 = vpack.c.b16 %v558, %v549
  %v658 = vpack.c.b16 %v559, %v550
  %v659 = vpack.c.b16 %v560, %v551
  %v660 = vpack.c.b16 %v561, %v552
  %v881 = vunpack.c.l.b16 %v122
  %v882 = vunpack.c.h.b16 %v122
  %v883 = vunpack.c.l.b16 %v123
  %v884 = vunpack.c.h.b16 %v123
  %v885 = vunpack.c.l.b16 %v124
  %v886 = vunpack.c.h.b16 %v124
  %v887 = vunpack.c.l.b16 %v125
  %v888 = vunpack.c.h.b16 %v125
  %v889 = vunpack.c.l.b16 %v126
  %v890 = vunpack.c.h.b16 %v126
  %v891 = vunpack.c.l.b16 %v127
  %v892 = vunpack.c.h.b16 %v127
  %v893 = vunpack.c.l.b16 %v128
  %v894 = vunpack.c.h.b16 %v128
  %v895 = vunpack.c.l.b16 %v129
  %v896 = vunpack.c.h.b16 %v129
  %v897 = vunpack.c.l.b16 %v130
  %v898 = vunpack.c.h.b16 %v130
  %v899 = vunpack.c.l.b16 %v131
  %v900 = vunpack.c.h.b16 %v131
  %v901 = vunpack.c.l.b16 %v132
  %v902 = vunpack.c.h.b16 %v132
  %v903 = vunpack.c.l.b16 %v133
  %v904 = vunpack.c.h.b16 %v133
  %v905 = vunpack.c.l.b16 %v134
  %v906 = vunpack.c.h.b16 %v134
  %v907 = vunpack.c.l.b16 %v135
  %v908 = vunpack.c.h.b16 %v135
  %v909 = vunpack.c.l.b16 %v136
  %v910 = vunpack.c.h.b16 %v136
  %v911 = vunpack.c.l.b16 %v137
  %v912 = vunpack.c.h.b16 %v137
  %v913 = vunpack.c.l.b16 %v138
  %v914 = vunpack.c.h.b16 %v138
  %v915 = vunpack.c.l.b16 %v139
  %v916 = vunpack.c.h.b16 %v139
  %v917 = vunpack.c.l.b16 %v140
  %v918 = vunpack.c.h.b16 %v140
  %v919 = vunpack.c.l.b16 %v141
  %v920 = vunpack.c.h.b16 %v141
  %v921 = vunpack.c.l.b16 %v142
  %v922 = vunpack.c.h.b16 %v142
  %v923 = vunpack.c.l.b16 %v143
  %v924 = vunpack.c.h.b16 %v143
  %v925 = vunpack.c.l.b16 %v144
  %v926 = vunpack.c.h.b16 %v144
  %v927 = vunpack.c.l.b16 %v145
  %v928 = vunpack.c.h.b16 %v145
  %v929 = vunpack.c.l.b16 %v146
  %v930 = vunpack.c.h.b16 %v146
  %v931 = vunpack.c.l.b16 %v147
  %v932 = vunpack.c.h.b16 %v147
  %v933 = vunpack.c.l.b16 %v148
  %v934 = vunpack.c.h.b16 %v148
  %v935 = vunpack.c.l.b16 %v149
  %v936 = vunpack.c.h.b16 %v149
  %v937 = vunpack.c.l.b16 %v150
  %v938 = vunpack.c.h.b16 %v150
  %v939 = vunpack.c.l.b16 %v151
  %v940 = vunpack.c.h.b16 %v151
  %v941 = vunpack.c.l.b16 %v152
  %v942 = vunpack.c.h.b16 %v152
  %v943 = vunpack.c.l.b16 %v153
  %v944 = vunpack.c.h.b16 %v153
  %v945 = vunpack.c.l.b16 %v154
  %v946 = vunpack.c.h.b16 %v154
  %v947 = vunpack.c.l.b16 %v155
  %v948 = vunpack.c.h.b16 %v155
  %v949 = vunpack.c.l.b16 %v156
  %v950 = vunpack.c.h.b16 %v156
  %v951 = vunpack.c.l.b16 %v157
  %v952 = vunpack.c.h.b16 %v157
  %v953 = vunpack.c.l.b16 %v158
  %v954 = vunpack.c.h.b16 %v158
  %v955 = vunpack.c.l.b16 %v159
  %v956 = vunpack.c.h.b16 %v159
  %v957 = vunpack.c.l.b16 %v160
  %v958 = vunpack.c.h.b16 %v160
  %v959 = vunpack.c.l.b16 %v161
  %v960 = vunpack.c.h.b16 %v161
  %v961 = vunpack.c.l.b16 %v162
  %v962 = vunpack.c.h.b16 %v162
  %v963 = vunpack.c.l.b16 %v163
  %v964 = vunpack.c.h.b16 %v163
  %v965 = vunpack.c.l.b16 %v164
  %v966 = vunpack.c.h.b16 %v164
  %v967 = vunpack.c.l.b16 %v165
  %v968 = vunpack.c.h.b16 %v165
  %v969 = vunpack.c.l.b16 %v166
  %v970 = vunpack.c.h.b16 %v166
  %v971 = vunpack.c.l.b16 %v167
  %v972 = vunpack.c.h.b16 %v167
  %v973 = vunpack.c.l.b16 %v168
  %v974 = vunpack.c.h.b16 %v168
  %v975 = vunpack.c.l.b16 %v169
  %v976 = vunpack.c.h.b16 %v169
  %v977 = vunpack.c.l.b16 %v170
  %v978 = vunpack.c.h.b16 %v170
  %v979 = vunpack.c.l.b16 %v171
  %v980 = vunpack.c.h.b16 %v171
  %v981 = vunpack.c.l.b16 %v172
  %v982 = vunpack.c.h.b16 %v172
  %v983 = vunpack.c.l.b16 %v173
  %v984 = vunpack.c.h.b16 %v173
  %v985 = vunpack.c.l.b16 %v174
  %v986 = vunpack.c.h.b16 %v174
  %v987 = vunpack.c.l.b16 %v175
  %v988 = vunpack.c.h.b16 %v175
  %v989 = vunpack.c.l.b16 %v176
  %v990 = vunpack.c.h.b16 %v176
  %v991 = vunpack.c.l.b16 %v177
  %v992 = vunpack.c.h.b16 %v177
  %v993 = vunpack.c.l.b16 %v178
  %v994 = vunpack.c.h.b16 %v178
  %v995 = vunpack.c.l.b16 %v179
  %v996 = vunpack.c.h.b16 %v179
  %v997 = vunpack.c.l.b16 %v180
  %v998 = vunpack.c.h.b16 %v180
  %v999 = vunpack.c.l.b16 %v181
  %v1000 = vunpack.c.h.b16 %v181
  %v1001 = vunpack.c.l.b16 %v182
  %v1002 = vunpack.c.h.b16 %v182
  %v1003 = vunpack.c.l.b16 %v183
  %v1004 = vunpack.c.h.b16 %v183
  %v1005 = vunpack.c.l.b16 %v184
  %v1006 = vunpack.c.h.b16 %v184
  %v1007 = vunpack.c.l.b16 %v185
  %v1008 = vunpack.c.h.b16 %v185
  %v1009 = vunpack.c.l.b16 %v186
  %v1010 = vunpack.c.h.b16 %v186
  %v1011 = vunpack.c.l.b16 %v187
  %v1012 = vunpack.c.h.b16 %v187
  %v1013 = vunpack.c.l.b16 %v188
  %v1014 = vunpack.c.h.b16 %v188
  %v1015 = vunpack.c.l.b16 %v189
  %v1016 = vunpack.c.h.b16 %v189
  %v1017 = vunpack.c.l.b16 %v190
  %v1018 = vunpack.c.h.b16 %v190
  %v1019 = vunpack.c.l.b16 %v191
  %v1020 = vunpack.c.h.b16 %v191
  %v1021 = vunpack.c.l.b16 %v192
  %v1022 = vunpack.c.h.b16 %v192
  %v1023 = vunpack.c.l.b16 %v193
  %v1024 = vunpack.c.h.b16 %v193
  %v1025 = vunpack.c.l.b16 %v194
  %v1026 = vunpack.c.h.b16 %v194
  %v1027 = vunpack.c.l.b16 %v195
  %v1028 = vunpack.c.h.b16 %v195
  %v1029 = vunpack.c.l.b16 %v196
  %v1030 = vunpack.c.h.b16 %v196
  %v1031 = vunpack.c.l.b16 %v197
  %v1032 = vunpack.c.h.b16 %v197
  %v1033 = vunpack.c.l.b16 %v198
  %v1034 = vunpack.c.h.b16 %v198
  %v1035 = vunpack.c.l.b16 %v199
  %v1036 = vunpack.c.h.b16 %v199
  %v1037 = vunpack.c.l.b16 %v200
  %v1038 = vunpack.c.h.b16 %v200
  %v1039 = vunpack.c.l.b16 %v201
  %v1040 = vunpack.c.h.b16 %v201
  %v1041 = vunpack.c.l.b16 %v202
  %v1042 = vunpack.c.h.b16 %v202
  %v1043 = vunpack.c.l.b16 %v203
  %v1044 = vunpack.c.h.b16 %v203
  %v1045 = vunpack.c.l.b16 %v204
  %v1046 = vunpack.c.h.b16 %v204
  %v1047 = vunpack.c.l.b16 %v205
  %v1048 = vunpack.c.h.b16 %v205
  %v1049 = vunpack.c.l.b16 %v206
  %v1050 = vunpack.c.h.b16 %v206
  %v1051 = vunpack.c.l.b16 %v207
  %v1052 = vunpack.c.h.b16 %v207
  %v1053 = vunpack.c.l.b16 %v208
  %v1054 = vunpack.c.h.b16 %v208
  %v1055 = vunpack.c.l.b16 %v209
  %v1056 = vunpack.c.h.b16 %v209
  %v1057 = vunpack.c.l.b16 %v210
  %v1058 = vunpack.c.h.b16 %v210
  %v1059 = vunpack.c.l.b16 %v211
  %v1060 = vunpack.c.h.b16 %v211
  %v1061 = vunpack.c.l.b16 %v212
  %v1062 = vunpack.c.h.b16 %v212
  %v1063 = vunpack.c.l.b16 %v213
  %v1064 = vunpack.c.h.b16 %v213
  %v1065 = vunpack.c.l.b16 %v214
  %v1066 = vunpack.c.h.b16 %v214
  %v1067 = vunpack.c.l.b16 %v215
  %v1068 = vunpack.c.h.b16 %v215
  %v1069 = vunpack.c.l.b16 %v216
  %v1070 = vunpack.c.h.b16 %v216
  %v1071 = vunpack.c.l.b16 %v217
  %v1072 = vunpack.c.h.b16 %v217
  %v1073 = vunpack.c.l.b16 %v218
  %v1074 = vunpack.c.h.b16 %v218
  %v1075 = vunpack.c.l.b16 %v219
  %v1076 = vunpack.c.h.b16 %v219
  %v1077 = vunpack.c.l.b16 %v220
  %v1078 = vunpack.c.h.b16 %v220
  %v1079 = vunpack.c.l.b16 %v221
  %v1080 = vunpack.c.h.b16 %v221
  %v1081 = vunpack.c.l.b16 %v222
  %v1082 = vunpack.c.h.b16 %v222
  %v1083 = vunpack.c.l.b16 %v223
  %v1084 = vunpack.c.h.b16 %v223
  %v1085 = vunpack.c.l.b16 %v224
  %v1086 = vunpack.c.h.b16 %v224
  %v1087 = vunpack.c.l.b16 %v225
  %v1088 = vunpack.c.h.b16 %v225
  %v1089 = vunpack.c.l.b16 %v226
  %v1090 = vunpack.c.h.b16 %v226
  %v1091 = vunpack.c.l.b16 %v227
  %v1092 = vunpack.c.h.b16 %v227
  %v1093 = vunpack.c.l.b16 %v228
  %v1094 = vunpack.c.h.b16 %v228
  %v1095 = vunpack.c.l.b16 %v229
  %v1096 = vunpack.c.h.b16 %v229
  %v1097 = vunpack.c.l.b16 %v230
  %v1098 = vunpack.c.h.b16 %v230
  %v1099 = vunpack.c.l.b16 %v231
  %v1100 = vunpack.c.h.b16 %v231
  %v1101 = vunpack.c.l.b16 %v232
  %v1102 = vunpack.c.h.b16 %v232
  %v1103 = vunpack.c.l.b16 %v233
  %v1104 = vunpack.c.h.b16 %v233
  %v1105 = vunpack.c.l.b16 %v234
  %v1106 = vunpack.c.h.b16 %v234
  %v1107 = vunpack.c.l.b16 %v235
  %v1108 = vunpack.c.h.b16 %v235
  %v1109 = vunpack.c.l.b16 %v236
  %v1110 = vunpack.c.h.b16 %v236
  %v1111 = vunpack.c.l.b16 %v237
  %v1112 = vunpack.c.h.b16 %v237
  %v1113 = vunpack.c.l.b16 %v238
  %v1114 = vunpack.c.h.b16 %v238
  %v1115 = vunpack.c.l.b16 %v239
  %v1116 = vunpack.c.h.b16 %v239
  %v1117 = vunpack.c.l.b16 %v240
  %v1118 = vunpack.c.h.b16 %v240
  %v1119 = vunpack.c.l.b16 %v241
  %v1120 = vunpack.c.h.b16 %v241
  %v1121 = vunpack.c.l.b16 %v242
  %v1122 = vunpack.c.h.b16 %v242
  %v1123 = vunpack.c.l.b16 %v243
  %v1124 = vunpack.c.h.b16 %v243
  %v1125 = vunpack.c.l.b16 %v244
  %v1126 = vunpack.c.h.b16 %v244
  %v1127 = vunpack.c.l.b16 %v245
  %v1128 = vunpack.c.h.b16 %v245
  %v1129 = vunpack.c.l.b16 %v246
  %v1130 = vunpack.c.h.b16 %v246
  %v1131 = vunpack.c.l.b16 %v247
  %v1132 = vunpack.c.h.b16 %v247
  %v1133 = vunpack.c.l.b16 %v248
  %v1134 = vunpack.c.h.b16 %v248
  %v1135 = vunpack.c.l.b16 %v249
  %v1136 = vunpack.c.h.b16 %v249
  %v1137 = vunpack.c.l.b16 %v250
  %v1138 = vunpack.c.h.b16 %v250
  %v1139 = vunpack.c.l.b16 %v251
  %v1140 = vunpack.c.h.b16 %v251
  %v1141 = vunpack.c.l.b16 %v252
  %v1142 = vunpack.c.h.b16 %v252
  %v1143 = vunpack.c.l.b16 %v253
  %v1144 = vunpack.c.h.b16 %v253
  %v1145 = vpack.c.b16 %v883, %v881
  %v1146 = vpack.c.b16 %v884, %v882
  %v1147 = vpack.c.b16 %v887, %v885
  %v1148 = vpack.c.b16 %v888, %v886
  %v1149 = vpack.c.b16 %v891, %v889
  %v1150 = vpack.c.b16 %v892, %v890
  %v1151 = vpack.c.b16 %v895, %v893
  %v1152 = vpack.c.b16 %v896, %v894
  %v1153 = vpack.c.b16 %v899, %v897
  %v1154 = vpack.c.b16 %v900, %v898
  %v1155 = vpack.c.b16 %v903, %v901
  %v1156 = vpack.c.b16 %v904, %v902
  %v1157 = vpack.c.b16 %v907, %v905
  %v1158 = vpack.c.b16 %v908, %v906
  %v1159 = vpack.c.b16 %v911, %v909
  %v1160 = vpack.c.b16 %v912, %v910
  %v1161 = vpack.c.b16 %v915, %v913
  %v1162 = vpack.c.b16 %v916, %v914
  %v1163 = vpack.c.b16 %v919, %v917
  %v1164 = vpack.c.b16 %v920, %v918
  %v1165 = vpack.c.b16 %v923, %v921
  %v1166 = vpack.c.b16 %v924, %v922
  %v1167 = vpack.c.b16 %v927, %v925
  %v1168 = vpack.c.b16 %v928, %v926
  %v1169 = vpack.c.b16 %v931, %v929
  %v1170 = vpack.c.b16 %v932, %v930
  %v1171 = vpack.c.b16 %v935, %v933
  %v1172 = vpack.c.b16 %v936, %v934
  %v1173 = vpack.c.b16 %v939, %v937
  %v1174 = vpack.c.b16 %v940, %v938
  %v1175 = vpack.c.b16 %v943, %v941
  %v1176 = vpack.c.b16 %v944, %v942
  %v1177 = vpack.c.b16 %v947, %v945
  %v1178 = vpack.c.b16 %v948, %v946
  %v1179 = vpack.c.b16 %v951, %v949
  %v1180 = vpack.c.b16 %v952, %v950
  %v1181 = vpack.c.b16 %v955, %v953
  %v1182 = vpack.c.b16 %v956, %v954
  %v1183 = vpack.c.b16 %v959, %v957
  %v1184 = vpack.c.b16 %v960, %v958
  %v1185 = vpack.c.b16 %v963, %v961
  %v1186 = vpack.c.b16 %v964, %v962
  %v1187 = vpack.c.b16 %v967, %v965
  %v1188 = vpack.c.b16 %v968, %v966
  %v1189 = vpack.c.b16 %v971, %v969
  %v1190 = vpack.c.b16 %v972, %v970
  %v1191 = vpack.c.b16 %v975, %v973
  %v1192 = vpack.c.b16 %v976, %v974
  %v1193 = vpack.c.b16 %v979, %v977
  %v1194 = vpack.c.b16 %v980, %v978
  %v1195 = vpack.c.b16 %v983, %v981
  %v1196 = vpack.c.b16 %v984, %v982
  %v1197 = vpack.c.b16 %v987, %v985
  %v1198 = vpack.c.b16 %v988, %v986
  %v1199 = vpack.c.b16 %v991, %v989
  %v1200 = vpack.c.b16 %v992, %v990
  %v1201 = vpack.c.b16 %v995, %v993
  %v1202 = vpack.c.b16 %v996, %v994
  %v1203 = vpack.c.b16 %v999, %v997
  %v1204 = vpack.c.b16 %v1000, %v998
  %v1205 = vpack.c.b16 %v1003, %v1001
  %v1206 = vpack.c.b16 %v1004, %v1002
  %v1207 = vpack.c.b16 %v1007, %v1005
  %v1208 = vpack.c.b16 %v1008, %v1006
  %v1209 = vpack.c.b16 %v1011, %v1009
  %v1210 = vpack.c.b16 %v1012, %v1010
  %v1211 = vpack.c.b16 %v1015, %v1013
  %v1212 = vpack.c.b16 %v1016, %v1014
  %v1213 = vpack.c.b16 %v1019, %v1017
  %v1214 = vpack.c.b16 %v1020, %v1018
  %v1215 = vpack.c.b16 %v1023, %v1021
  %v1216 = vpack.c.b16 %v1024, %v1022
  %v1217 = vpack.c.b16 %v1027, %v1025
  %v1218 = vpack.c.b16 %v1028, %v1026
  %v1219 = vpack.c.b16 %v1031, %v1029
  %v1220 = vpack.c.b16 %v1032, %v1030
  %v1221 = vpack.c.b16 %v1035, %v1033
  %v1222 = vpack.c.b16 %v1036, %v1034
  %v1223 = vpack.c.b16 %v1039, %v1037
  %v1224 = vpack.c.b16 %v1040, %v1038
  %v1225 = vpack.c.b16 %v1043, %v1041
  %v1226 = vpack.c.b16 %v1044, %v1042
  %v1227 = vpack.c.b16 %v1047, %v1045
  %v1228 = vpack.c.b16 %v1048, %v1046
  %v1229 = vpack.c.b16 %v1051, %v1049
  %v1230 = vpack.c.b16 %v1052, %v1050
  %v1231 = vpack.c.b16 %v1055, %v1053
  %v1232 = vpack.c.b16 %v1056, %v1054
  %v1233 = vpack.c.b16 %v1059, %v1057
  %v1234 = vpack.c.b16 %v1060, %v1058
  %v1235 = vpack.c.b16 %v1063, %v1061
  %v1236 = vpack.c.b16 %v1064, %v1062
  %v1237 = vpack.c.b16 %v1067, %v1065
  %v1238 = vpack.c.b16 %v1068, %v1066
  %v1239 = vpack.c.b16 %v1071, %v1069
  %v1240 = vpack.c.b16 %v1072, %v1070
  %v1241 = vpack.c.b16 %v1075, %v1073
  %v1242 = vpack.c.b16 %v1076, %v1074
  %v1243 = vpack.c.b16 %v1079, %v1077
  %v1244 = vpack.c.b16 %v1080, %v1078
  %v1245 = vpack.c.b16 %v1083, %v1081
  %v1246 = vpack.c.b16 %v1084, %v1082
  %v1247 = vpack.c.b16 %v1087, %v1085
  %v1248 = vpack.c.b16 %v1088, %v1086
  %v1249 = vpack.c.b16 %v1091, %v1089
  %v1250 = vpack.c.b16 %v1092, %v1090
  %v1251 = vpack.c.b16 %v1095, %v1093
  %v1252 = vpack.c.b16 %v1096, %v1094
  %v1253 = vpack.c.b16 %v1099, %v1097
  %v1254 = vpack.c.b16 %v1100, %v1098
  %v1255 = vpack.c.b16 %v1103, %v1101
  %v1256 = vpack.c.b16 %v1104, %v1102
  %v1257 = vpack.c.b16 %v1107, %v1105
  %v1258 = vpack.c.b16 %v1108, %v1106
  %v1259 = vpack.c.b16 %v1111, %v1109
  %v1260 = vpack.c.b16 %v1112, %v1110
  %v1261 = vpack.c.b16 %v1115, %v1113
  %v1262 = vpack.c.b16 %v1116, %v1114
  %v1263 = vpack.c.b16 %v1119, %v1117
  %v1264 = vpack.c.b16 %v1120, %v1118
  %v1265 = vpack.c.b16 %v1123, %v1121
  %v1266 = vpack.c.b16 %v1124, %v1122
  %v1267 = vpack.c.b16 %v1127, %v1125
  %v1268 = vpack.c.b16 %v1128, %v1126
  %v1269 = vpack.c.b16 %v1131, %v1129
  %v1270 = vpack.c.b16 %v1132, %v1130
  %v1271 = vpack.c.b16 %v1135, %v1133
  %v1272 = vpack.c.b16 %v1136, %v1134
  %v1273 = vpack.c.b16 %v1139, %v1137
  %v1274 = vpack.c.b16 %v1140, %v1138
  %v1275 = vpack.c.b16 %v1143, %v1141
  %v1276 = vpack.c.b16 %v1144, %v1142
  %vm1409 = vcmask 261120
  %v1411 = vsel %vm1409, %v570, 0
  %v1414 = vsel %vm1409, %v579, 0
  %v1417 = vsel %vm1409, %v588, 0
  %v1420 = vsel %vm1409, %v597, 0
  %v1423 = vsel %vm1409, %v606, 0
  %v1426 = vsel %vm1409, %v615, 0
  %v1429 = vsel %vm1409, %v624, 0
  %v1432 = vsel %vm1409, %v633, 0
  %v1435 = vsel %vm1409, %v642, 0
  %v1438 = vsel %vm1409, %v651, 0
  %v1441 = vsel %vm1409, %v660, 0
  %1443 = vmatprep.subr.bf16.mxu0 %v1160
  %1444 = vmatpush1.bf16.msra.mxu0 %v1159
  %1445 = vmatprep.subr.bf16.mxu0 %v1158
  %1446 = vmatpush1.bf16.msra.mxu0 %v1157
  %1447 = vmatprep.subr.bf16.mxu0 %v1156
  %1448 = vmatpush1.bf16.msra.mxu0 %v1155
  %1449 = vmatprep.subr.bf16.mxu0 %v1154
  %1450 = vmatpush1.bf16.msra.mxu0 %v1153
  %1451 = vmatprep.subr.bf16.mxu0 %v1152
  %1452 = vmatpush1.bf16.msra.mxu0 %v1151
  %1453 = vmatprep.subr.bf16.mxu0 %v1150
  %1454 = vmatpush1.bf16.msra.mxu0 %v1149
  %1455 = vmatprep.subr.bf16.mxu0 %v1148
  %1456 = vmatpush1.bf16.msra.mxu0 %v1147
  %1457 = vmatprep.subr.bf16.mxu0 %v1146
  %1458 = vmatpush1.bf16.msra.mxu0 %v1145
  %1459 = vmatprep.subr.bf16.mxu0 %v1176
  %1460 = vmatpush2.bf16.msra.mxu0 %v1175
  %1461 = vmatprep.subr.bf16.mxu0 %v1174
  %1462 = vmatpush2.bf16.msra.mxu0 %v1173
  %1463 = vmatprep.subr.bf16.mxu0 %v1172
  %1464 = vmatpush2.bf16.msra.mxu0 %v1171
  %1465 = vmatprep.subr.bf16.mxu0 %v1170
  %1466 = vmatpush2.bf16.msra.mxu0 %v1169
  %1467 = vmatprep.subr.bf16.mxu0 %v1168
  %1468 = vmatpush2.bf16.msra.mxu0 %v1167
  %1469 = vmatprep.subr.bf16.mxu0 %v1166
  %1470 = vmatpush2.bf16.msra.mxu0 %v1165
  %1471 = vmatprep.subr.bf16.mxu0 %v1164
  %1472 = vmatpush2.bf16.msra.mxu0 %v1163
  %1473 = vmatprep.subr.bf16.mxu0 %v1162
  %1474 = vmatpush2.bf16.msra.mxu0 %v1161
  %1475 = vmatprep.mubr.bf16.mxu0 %v563
  %1476 = vmatmul.mubr.bf16.gmra.mxu0 %v562
  %v1477 = vpop.f32.mrf.mxu0
  %v1478 = vadd.f32 0.0, %v1477
  %v1479 = vpop.f32.mrf.mxu0
  %v1480 = vadd.f32 0.0, %v1479
  %v1481 = vpop.f32.mrf.mxu0
  %v1482 = vadd.f32 0.0, %v1481
  %v1483 = vpop.f32.mrf.mxu0
  %v1484 = vadd.f32 0.0, %v1483
  %1485 = vmatprep.mubr.bf16.mxu0 %v572
  %1486 = vmatmul.mubr.bf16.gmra.mxu0 %v571
  %v1487 = vpop.f32.mrf.mxu0
  %v1488 = vadd.f32 0.0, %v1487
  %v1489 = vpop.f32.mrf.mxu0
  %v1490 = vadd.f32 0.0, %v1489
  %v1491 = vpop.f32.mrf.mxu0
  %v1492 = vadd.f32 0.0, %v1491
  %v1493 = vpop.f32.mrf.mxu0
  %v1494 = vadd.f32 0.0, %v1493
  %1495 = vmatprep.mubr.bf16.mxu0 %v581
  %1496 = vmatmul.mubr.bf16.gmra.mxu0 %v580
  %v1497 = vpop.f32.mrf.mxu0
  %v1498 = vadd.f32 0.0, %v1497
  %v1499 = vpop.f32.mrf.mxu0
  %v1500 = vadd.f32 0.0, %v1499
  %v1501 = vpop.f32.mrf.mxu0
  %v1502 = vadd.f32 0.0, %v1501
  %v1503 = vpop.f32.mrf.mxu0
  %v1504 = vadd.f32 0.0, %v1503
  %1505 = vmatprep.mubr.bf16.mxu0 %v590
  %1506 = vmatmul.mubr.bf16.gmra.mxu0 %v589
  %v1507 = vpop.f32.mrf.mxu0
  %v1508 = vadd.f32 0.0, %v1507
  %v1509 = vpop.f32.mrf.mxu0
  %v1510 = vadd.f32 0.0, %v1509
  %v1511 = vpop.f32.mrf.mxu0
  %v1512 = vadd.f32 0.0, %v1511
  %v1513 = vpop.f32.mrf.mxu0
  %v1514 = vadd.f32 0.0, %v1513
  %1515 = vmatprep.mubr.bf16.mxu0 %v599
  %1516 = vmatmul.mubr.bf16.gmra.mxu0 %v598
  %v1517 = vpop.f32.mrf.mxu0
  %v1518 = vadd.f32 0.0, %v1517
  %v1519 = vpop.f32.mrf.mxu0
  %v1520 = vadd.f32 0.0, %v1519
  %v1521 = vpop.f32.mrf.mxu0
  %v1522 = vadd.f32 0.0, %v1521
  %v1523 = vpop.f32.mrf.mxu0
  %v1524 = vadd.f32 0.0, %v1523
  %1525 = vmatprep.mubr.bf16.mxu0 %v608
  %1526 = vmatmul.mubr.bf16.gmra.mxu0 %v607
  %v1527 = vpop.f32.mrf.mxu0
  %v1528 = vadd.f32 0.0, %v1527
  %v1529 = vpop.f32.mrf.mxu0
  %v1530 = vadd.f32 0.0, %v1529
  %v1531 = vpop.f32.mrf.mxu0
  %v1532 = vadd.f32 0.0, %v1531
  %v1533 = vpop.f32.mrf.mxu0
  %v1534 = vadd.f32 0.0, %v1533
  %1535 = vmatprep.mubr.bf16.mxu0 %v617
  %1536 = vmatmul.mubr.bf16.gmra.mxu0 %v616
  %v1537 = vpop.f32.mrf.mxu0
  %v1538 = vadd.f32 0.0, %v1537
  %v1539 = vpop.f32.mrf.mxu0
  %v1540 = vadd.f32 0.0, %v1539
  %v1541 = vpop.f32.mrf.mxu0
  %v1542 = vadd.f32 0.0, %v1541
  %v1543 = vpop.f32.mrf.mxu0
  %v1544 = vadd.f32 0.0, %v1543
  %1545 = vmatprep.mubr.bf16.mxu0 %v626
  %1546 = vmatmul.mubr.bf16.gmra.mxu0 %v625
  %v1547 = vpop.f32.mrf.mxu0
  %v1548 = vadd.f32 0.0, %v1547
  %v1549 = vpop.f32.mrf.mxu0
  %v1550 = vadd.f32 0.0, %v1549
  %v1551 = vpop.f32.mrf.mxu0
  %v1552 = vadd.f32 0.0, %v1551
  %v1553 = vpop.f32.mrf.mxu0
  %v1554 = vadd.f32 0.0, %v1553
  %1555 = vmatprep.mubr.bf16.mxu0 %v635
  %1556 = vmatmul.mubr.bf16.gmra.mxu0 %v634
  %v1557 = vpop.f32.mrf.mxu0
  %v1558 = vadd.f32 0.0, %v1557
  %v1559 = vpop.f32.mrf.mxu0
  %v1560 = vadd.f32 0.0, %v1559
  %v1561 = vpop.f32.mrf.mxu0
  %v1562 = vadd.f32 0.0, %v1561
  %v1563 = vpop.f32.mrf.mxu0
  %v1564 = vadd.f32 0.0, %v1563
  %1565 = vmatprep.mubr.bf16.mxu0 %v644
  %1566 = vmatmul.mubr.bf16.gmra.mxu0 %v643
  %v1567 = vpop.f32.mrf.mxu0
  %v1568 = vadd.f32 0.0, %v1567
  %v1569 = vpop.f32.mrf.mxu0
  %v1570 = vadd.f32 0.0, %v1569
  %v1571 = vpop.f32.mrf.mxu0
  %v1572 = vadd.f32 0.0, %v1571
  %v1573 = vpop.f32.mrf.mxu0
  %v1574 = vadd.f32 0.0, %v1573
  %1575 = vmatprep.mubr.bf16.mxu0 %v653
  %1576 = vmatmul.mubr.bf16.gmra.mxu0 %v652
  %v1577 = vpop.f32.mrf.mxu0
  %v1578 = vadd.f32 0.0, %v1577
  %v1579 = vpop.f32.mrf.mxu0
  %v1580 = vadd.f32 0.0, %v1579
  %v1581 = vpop.f32.mrf.mxu0
  %v1582 = vadd.f32 0.0, %v1581
  %v1583 = vpop.f32.mrf.mxu0
  %v1584 = vadd.f32 0.0, %v1583
  %1585 = vdwg.mxu0
  %1586 = vmatprep.subr.bf16.mxu0 %v1192
  %1587 = vmatpush1.bf16.msra.mxu0 %v1191
  %1588 = vmatprep.subr.bf16.mxu0 %v1190
  %1589 = vmatpush1.bf16.msra.mxu0 %v1189
  %1590 = vmatprep.subr.bf16.mxu0 %v1188
  %1591 = vmatpush1.bf16.msra.mxu0 %v1187
  %1592 = vmatprep.subr.bf16.mxu0 %v1186
  %1593 = vmatpush1.bf16.msra.mxu0 %v1185
  %1594 = vmatprep.subr.bf16.mxu0 %v1184
  %1595 = vmatpush1.bf16.msra.mxu0 %v1183
  %1596 = vmatprep.subr.bf16.mxu0 %v1182
  %1597 = vmatpush1.bf16.msra.mxu0 %v1181
  %1598 = vmatprep.subr.bf16.mxu0 %v1180
  %1599 = vmatpush1.bf16.msra.mxu0 %v1179
  %1600 = vmatprep.subr.bf16.mxu0 %v1178
  %1601 = vmatpush1.bf16.msra.mxu0 %v1177
  %1602 = vmatprep.subr.bf16.mxu0 %v1208
  %1603 = vmatpush2.bf16.msra.mxu0 %v1207
  %1604 = vmatprep.subr.bf16.mxu0 %v1206
  %1605 = vmatpush2.bf16.msra.mxu0 %v1205
  %1606 = vmatprep.subr.bf16.mxu0 %v1204
  %1607 = vmatpush2.bf16.msra.mxu0 %v1203
  %1608 = vmatprep.subr.bf16.mxu0 %v1202
  %1609 = vmatpush2.bf16.msra.mxu0 %v1201
  %1610 = vmatprep.subr.bf16.mxu0 %v1200
  %1611 = vmatpush2.bf16.msra.mxu0 %v1199
  %1612 = vmatprep.subr.bf16.mxu0 %v1198
  %1613 = vmatpush2.bf16.msra.mxu0 %v1197
  %1614 = vmatprep.subr.bf16.mxu0 %v1196
  %1615 = vmatpush2.bf16.msra.mxu0 %v1195
  %1616 = vmatprep.subr.bf16.mxu0 %v1194
  %1617 = vmatpush2.bf16.msra.mxu0 %v1193
  %1618 = vmatprep.mubr.bf16.mxu0 %v565
  %1619 = vmatmul.mubr.bf16.gmra.mxu0 %v564
  %v1620 = vpop.f32.mrf.mxu0
  %v1621 = vadd.f32 %v1478, %v1620
  %v1622 = vpop.f32.mrf.mxu0
  %v1623 = vadd.f32 %v1480, %v1622
  %v1624 = vpop.f32.mrf.mxu0
  %v1625 = vadd.f32 %v1482, %v1624
  %v1626 = vpop.f32.mrf.mxu0
  %v1627 = vadd.f32 %v1484, %v1626
  %1628 = vmatprep.mubr.bf16.mxu0 %v574
  %1629 = vmatmul.mubr.bf16.gmra.mxu0 %v573
  %v1630 = vpop.f32.mrf.mxu0
  %v1631 = vadd.f32 %v1488, %v1630
  %v1632 = vpop.f32.mrf.mxu0
  %v1633 = vadd.f32 %v1490, %v1632
  %v1634 = vpop.f32.mrf.mxu0
  %v1635 = vadd.f32 %v1492, %v1634
  %v1636 = vpop.f32.mrf.mxu0
  %v1637 = vadd.f32 %v1494, %v1636
  %1638 = vmatprep.mubr.bf16.mxu0 %v583
  %1639 = vmatmul.mubr.bf16.gmra.mxu0 %v582
  %v1640 = vpop.f32.mrf.mxu0
  %v1641 = vadd.f32 %v1498, %v1640
  %v1642 = vpop.f32.mrf.mxu0
  %v1643 = vadd.f32 %v1500, %v1642
  %v1644 = vpop.f32.mrf.mxu0
  %v1645 = vadd.f32 %v1502, %v1644
  %v1646 = vpop.f32.mrf.mxu0
  %v1647 = vadd.f32 %v1504, %v1646
  %1648 = vmatprep.mubr.bf16.mxu0 %v592
  %1649 = vmatmul.mubr.bf16.gmra.mxu0 %v591
  %v1650 = vpop.f32.mrf.mxu0
  %v1651 = vadd.f32 %v1508, %v1650
  %v1652 = vpop.f32.mrf.mxu0
  %v1653 = vadd.f32 %v1510, %v1652
  %v1654 = vpop.f32.mrf.mxu0
  %v1655 = vadd.f32 %v1512, %v1654
  %v1656 = vpop.f32.mrf.mxu0
  %v1657 = vadd.f32 %v1514, %v1656
  %1658 = vmatprep.mubr.bf16.mxu0 %v601
  %1659 = vmatmul.mubr.bf16.gmra.mxu0 %v600
  %v1660 = vpop.f32.mrf.mxu0
  %v1661 = vadd.f32 %v1518, %v1660
  %v1662 = vpop.f32.mrf.mxu0
  %v1663 = vadd.f32 %v1520, %v1662
  %v1664 = vpop.f32.mrf.mxu0
  %v1665 = vadd.f32 %v1522, %v1664
  %v1666 = vpop.f32.mrf.mxu0
  %v1667 = vadd.f32 %v1524, %v1666
  %1668 = vmatprep.mubr.bf16.mxu0 %v610
  %1669 = vmatmul.mubr.bf16.gmra.mxu0 %v609
  %v1670 = vpop.f32.mrf.mxu0
  %v1671 = vadd.f32 %v1528, %v1670
  %v1672 = vpop.f32.mrf.mxu0
  %v1673 = vadd.f32 %v1530, %v1672
  %v1674 = vpop.f32.mrf.mxu0
  %v1675 = vadd.f32 %v1532, %v1674
  %v1676 = vpop.f32.mrf.mxu0
  %v1677 = vadd.f32 %v1534, %v1676
  %1678 = vmatprep.mubr.bf16.mxu0 %v619
  %1679 = vmatmul.mubr.bf16.gmra.mxu0 %v618
  %v1680 = vpop.f32.mrf.mxu0
  %v1681 = vadd.f32 %v1538, %v1680
  %v1682 = vpop.f32.mrf.mxu0
  %v1683 = vadd.f32 %v1540, %v1682
  %v1684 = vpop.f32.mrf.mxu0
  %v1685 = vadd.f32 %v1542, %v1684
  %v1686 = vpop.f32.mrf.mxu0
  %v1687 = vadd.f32 %v1544, %v1686
  %1688 = vmatprep.mubr.bf16.mxu0 %v628
  %1689 = vmatmul.mubr.bf16.gmra.mxu0 %v627
  %v1690 = vpop.f32.mrf.mxu0
  %v1691 = vadd.f32 %v1548, %v1690
  %v1692 = vpop.f32.mrf.mxu0
  %v1693 = vadd.f32 %v1550, %v1692
  %v1694 = vpop.f32.mrf.mxu0
  %v1695 = vadd.f32 %v1552, %v1694
  %v1696 = vpop.f32.mrf.mxu0
  %v1697 = vadd.f32 %v1554, %v1696
  %1698 = vmatprep.mubr.bf16.mxu0 %v637
  %1699 = vmatmul.mubr.bf16.gmra.mxu0 %v636
  %v1700 = vpop.f32.mrf.mxu0
  %v1701 = vadd.f32 %v1558, %v1700
  %v1702 = vpop.f32.mrf.mxu0
  %v1703 = vadd.f32 %v1560, %v1702
  %v1704 = vpop.f32.mrf.mxu0
  %v1705 = vadd.f32 %v1562, %v1704
  %v1706 = vpop.f32.mrf.mxu0
  %v1707 = vadd.f32 %v1564, %v1706
  %1708 = vmatprep.mubr.bf16.mxu0 %v646
  %1709 = vmatmul.mubr.bf16.gmra.mxu0 %v645
  %v1710 = vpop.f32.mrf.mxu0
  %v1711 = vadd.f32 %v1568, %v1710
  %v1712 = vpop.f32.mrf.mxu0
  %v1713 = vadd.f32 %v1570, %v1712
  %v1714 = vpop.f32.mrf.mxu0
  %v1715 = vadd.f32 %v1572, %v1714
  %v1716 = vpop.f32.mrf.mxu0
  %v1717 = vadd.f32 %v1574, %v1716
  %1718 = vmatprep.mubr.bf16.mxu0 %v655
  %1719 = vmatmul.mubr.bf16.gmra.mxu0 %v654
  %v1720 = vpop.f32.mrf.mxu0
  %v1721 = vadd.f32 %v1578, %v1720
  %v1722 = vpop.f32.mrf.mxu0
  %v1723 = vadd.f32 %v1580, %v1722
  %v1724 = vpop.f32.mrf.mxu0
  %v1725 = vadd.f32 %v1582, %v1724
  %v1726 = vpop.f32.mrf.mxu0
  %v1727 = vadd.f32 %v1584, %v1726
  %1728 = vdwg.mxu0
  %1729 = vmatprep.subr.bf16.mxu0 %v1224
  %1730 = vmatpush1.bf16.msra.mxu0 %v1223
  %1731 = vmatprep.subr.bf16.mxu0 %v1222
  %1732 = vmatpush1.bf16.msra.mxu0 %v1221
  %1733 = vmatprep.subr.bf16.mxu0 %v1220
  %1734 = vmatpush1.bf16.msra.mxu0 %v1219
  %1735 = vmatprep.subr.bf16.mxu0 %v1218
  %1736 = vmatpush1.bf16.msra.mxu0 %v1217
  %1737 = vmatprep.subr.bf16.mxu0 %v1216
  %1738 = vmatpush1.bf16.msra.mxu0 %v1215
  %1739 = vmatprep.subr.bf16.mxu0 %v1214
  %1740 = vmatpush1.bf16.msra.mxu0 %v1213
  %1741 = vmatprep.subr.bf16.mxu0 %v1212
  %1742 = vmatpush1.bf16.msra.mxu0 %v1211
  %1743 = vmatprep.subr.bf16.mxu0 %v1210
  %1744 = vmatpush1.bf16.msra.mxu0 %v1209
  %1745 = vmatprep.subr.bf16.mxu0 %v1240
  %1746 = vmatpush2.bf16.msra.mxu0 %v1239
  %1747 = vmatprep.subr.bf16.mxu0 %v1238
  %1748 = vmatpush2.bf16.msra.mxu0 %v1237
  %1749 = vmatprep.subr.bf16.mxu0 %v1236
  %1750 = vmatpush2.bf16.msra.mxu0 %v1235
  %1751 = vmatprep.subr.bf16.mxu0 %v1234
  %1752 = vmatpush2.bf16.msra.mxu0 %v1233
  %1753 = vmatprep.subr.bf16.mxu0 %v1232
  %1754 = vmatpush2.bf16.msra.mxu0 %v1231
  %1755 = vmatprep.subr.bf16.mxu0 %v1230
  %1756 = vmatpush2.bf16.msra.mxu0 %v1229
  %1757 = vmatprep.subr.bf16.mxu0 %v1228
  %1758 = vmatpush2.bf16.msra.mxu0 %v1227
  %1759 = vmatprep.subr.bf16.mxu0 %v1226
  %1760 = vmatpush2.bf16.msra.mxu0 %v1225
  %1761 = vmatprep.mubr.bf16.mxu0 %v567
  %1762 = vmatmul.mubr.bf16.gmra.mxu0 %v566
  %v1763 = vpop.f32.mrf.mxu0
  %v1764 = vadd.f32 %v1621, %v1763
  %v1765 = vpop.f32.mrf.mxu0
  %v1766 = vadd.f32 %v1623, %v1765
  %v1767 = vpop.f32.mrf.mxu0
  %v1768 = vadd.f32 %v1625, %v1767
  %v1769 = vpop.f32.mrf.mxu0
  %v1770 = vadd.f32 %v1627, %v1769
  %1771 = vmatprep.mubr.bf16.mxu0 %v576
  %1772 = vmatmul.mubr.bf16.gmra.mxu0 %v575
  %v1773 = vpop.f32.mrf.mxu0
  %v1774 = vadd.f32 %v1631, %v1773
  %v1775 = vpop.f32.mrf.mxu0
  %v1776 = vadd.f32 %v1633, %v1775
  %v1777 = vpop.f32.mrf.mxu0
  %v1778 = vadd.f32 %v1635, %v1777
  %v1779 = vpop.f32.mrf.mxu0
  %v1780 = vadd.f32 %v1637, %v1779
  %1781 = vmatprep.mubr.bf16.mxu0 %v585
  %1782 = vmatmul.mubr.bf16.gmra.mxu0 %v584
  %v1783 = vpop.f32.mrf.mxu0
  %v1784 = vadd.f32 %v1641, %v1783
  %v1785 = vpop.f32.mrf.mxu0
  %v1786 = vadd.f32 %v1643, %v1785
  %v1787 = vpop.f32.mrf.mxu0
  %v1788 = vadd.f32 %v1645, %v1787
  %v1789 = vpop.f32.mrf.mxu0
  %v1790 = vadd.f32 %v1647, %v1789
  %1791 = vmatprep.mubr.bf16.mxu0 %v594
  %1792 = vmatmul.mubr.bf16.gmra.mxu0 %v593
  %v1793 = vpop.f32.mrf.mxu0
  %v1794 = vadd.f32 %v1651, %v1793
  %v1795 = vpop.f32.mrf.mxu0
  %v1796 = vadd.f32 %v1653, %v1795
  %v1797 = vpop.f32.mrf.mxu0
  %v1798 = vadd.f32 %v1655, %v1797
  %v1799 = vpop.f32.mrf.mxu0
  %v1800 = vadd.f32 %v1657, %v1799
  %1801 = vmatprep.mubr.bf16.mxu0 %v603
  %1802 = vmatmul.mubr.bf16.gmra.mxu0 %v602
  %v1803 = vpop.f32.mrf.mxu0
  %v1804 = vadd.f32 %v1661, %v1803
  %v1805 = vpop.f32.mrf.mxu0
  %v1806 = vadd.f32 %v1663, %v1805
  %v1807 = vpop.f32.mrf.mxu0
  %v1808 = vadd.f32 %v1665, %v1807
  %v1809 = vpop.f32.mrf.mxu0
  %v1810 = vadd.f32 %v1667, %v1809
  %1811 = vmatprep.mubr.bf16.mxu0 %v612
  %1812 = vmatmul.mubr.bf16.gmra.mxu0 %v611
  %v1813 = vpop.f32.mrf.mxu0
  %v1814 = vadd.f32 %v1671, %v1813
  %v1815 = vpop.f32.mrf.mxu0
  %v1816 = vadd.f32 %v1673, %v1815
  %v1817 = vpop.f32.mrf.mxu0
  %v1818 = vadd.f32 %v1675, %v1817
  %v1819 = vpop.f32.mrf.mxu0
  %v1820 = vadd.f32 %v1677, %v1819
  %1821 = vmatprep.mubr.bf16.mxu0 %v621
  %1822 = vmatmul.mubr.bf16.gmra.mxu0 %v620
  %v1823 = vpop.f32.mrf.mxu0
  %v1824 = vadd.f32 %v1681, %v1823
  %v1825 = vpop.f32.mrf.mxu0
  %v1826 = vadd.f32 %v1683, %v1825
  %v1827 = vpop.f32.mrf.mxu0
  %v1828 = vadd.f32 %v1685, %v1827
  %v1829 = vpop.f32.mrf.mxu0
  %v1830 = vadd.f32 %v1687, %v1829
  %1831 = vmatprep.mubr.bf16.mxu0 %v630
  %1832 = vmatmul.mubr.bf16.gmra.mxu0 %v629
  %v1833 = vpop.f32.mrf.mxu0
  %v1834 = vadd.f32 %v1691, %v1833
  %v1835 = vpop.f32.mrf.mxu0
  %v1836 = vadd.f32 %v1693, %v1835
  %v1837 = vpop.f32.mrf.mxu0
  %v1838 = vadd.f32 %v1695, %v1837
  %v1839 = vpop.f32.mrf.mxu0
  %v1840 = vadd.f32 %v1697, %v1839
  %1841 = vmatprep.mubr.bf16.mxu0 %v639
  %1842 = vmatmul.mubr.bf16.gmra.mxu0 %v638
  %v1843 = vpop.f32.mrf.mxu0
  %v1844 = vadd.f32 %v1701, %v1843
  %v1845 = vpop.f32.mrf.mxu0
  %v1846 = vadd.f32 %v1703, %v1845
  %v1847 = vpop.f32.mrf.mxu0
  %v1848 = vadd.f32 %v1705, %v1847
  %v1849 = vpop.f32.mrf.mxu0
  %v1850 = vadd.f32 %v1707, %v1849
  %1851 = vmatprep.mubr.bf16.mxu0 %v648
  %1852 = vmatmul.mubr.bf16.gmra.mxu0 %v647
  %v1853 = vpop.f32.mrf.mxu0
  %v1854 = vadd.f32 %v1711, %v1853
  %v1855 = vpop.f32.mrf.mxu0
  %v1856 = vadd.f32 %v1713, %v1855
  %v1857 = vpop.f32.mrf.mxu0
  %v1858 = vadd.f32 %v1715, %v1857
  %v1859 = vpop.f32.mrf.mxu0
  %v1860 = vadd.f32 %v1717, %v1859
  %1861 = vmatprep.mubr.bf16.mxu0 %v657
  %1862 = vmatmul.mubr.bf16.gmra.mxu0 %v656
  %v1863 = vpop.f32.mrf.mxu0
  %v1864 = vadd.f32 %v1721, %v1863
  %v1865 = vpop.f32.mrf.mxu0
  %v1866 = vadd.f32 %v1723, %v1865
  %v1867 = vpop.f32.mrf.mxu0
  %v1868 = vadd.f32 %v1725, %v1867
  %v1869 = vpop.f32.mrf.mxu0
  %v1870 = vadd.f32 %v1727, %v1869
  %1871 = vdwg.mxu0
  %1872 = vmatprep.subr.bf16.mxu0 %v1256
  %1873 = vmatpush1.bf16.msra.mxu0 %v1255
  %1874 = vmatprep.subr.bf16.mxu0 %v1254
  %1875 = vmatpush1.bf16.msra.mxu0 %v1253
  %1876 = vmatprep.subr.bf16.mxu0 %v1252
  %1877 = vmatpush1.bf16.msra.mxu0 %v1251
  %1878 = vmatprep.subr.bf16.mxu0 %v1250
  %1879 = vmatpush1.bf16.msra.mxu0 %v1249
  %1880 = vmatprep.subr.bf16.mxu0 %v1248
  %1881 = vmatpush1.bf16.msra.mxu0 %v1247
  %1882 = vmatprep.subr.bf16.mxu0 %v1246
  %1883 = vmatpush1.bf16.msra.mxu0 %v1245
  %1884 = vmatprep.subr.bf16.mxu0 %v1244
  %1885 = vmatpush1.bf16.msra.mxu0 %v1243
  %1886 = vmatprep.subr.bf16.mxu0 %v1242
  %1887 = vmatpush1.bf16.msra.mxu0 %v1241
  %1888 = vmatprep.subr.bf16.mxu0 %v1272
  %1889 = vmatpush2.bf16.msra.mxu0 %v1271
  %1890 = vmatprep.subr.bf16.mxu0 %v1270
  %1891 = vmatpush2.bf16.msra.mxu0 %v1269
  %1892 = vmatprep.subr.bf16.mxu0 %v1268
  %1893 = vmatpush2.bf16.msra.mxu0 %v1267
  %1894 = vmatprep.subr.bf16.mxu0 %v1266
  %1895 = vmatpush2.bf16.msra.mxu0 %v1265
  %1896 = vmatprep.subr.bf16.mxu0 %v1264
  %1897 = vmatpush2.bf16.msra.mxu0 %v1263
  %1898 = vmatprep.subr.bf16.mxu0 %v1262
  %1899 = vmatpush2.bf16.msra.mxu0 %v1261
  %1900 = vmatprep.subr.bf16.mxu0 %v1260
  %1901 = vmatpush2.bf16.msra.mxu0 %v1259
  %1902 = vmatprep.subr.bf16.mxu0 %v1258
  %1903 = vmatpush2.bf16.msra.mxu0 %v1257
  %1904 = vmatprep.mubr.bf16.mxu0 %v569
  %1905 = vmatmul.mubr.bf16.gmra.mxu0 %v568
  %v1906 = vpop.f32.mrf.mxu0
  %v1907 = vadd.f32 %v1764, %v1906
  %v1908 = vpop.f32.mrf.mxu0
  %v1909 = vadd.f32 %v1766, %v1908
  %v1910 = vpop.f32.mrf.mxu0
  %v1911 = vadd.f32 %v1768, %v1910
  %v1912 = vpop.f32.mrf.mxu0
  %v1913 = vadd.f32 %v1770, %v1912
  %1914 = vmatprep.mubr.bf16.mxu0 %v578
  %1915 = vmatmul.mubr.bf16.gmra.mxu0 %v577
  %v1916 = vpop.f32.mrf.mxu0
  %v1917 = vadd.f32 %v1774, %v1916
  %v1918 = vpop.f32.mrf.mxu0
  %v1919 = vadd.f32 %v1776, %v1918
  %v1920 = vpop.f32.mrf.mxu0
  %v1921 = vadd.f32 %v1778, %v1920
  %v1922 = vpop.f32.mrf.mxu0
  %v1923 = vadd.f32 %v1780, %v1922
  %1924 = vmatprep.mubr.bf16.mxu0 %v587
  %1925 = vmatmul.mubr.bf16.gmra.mxu0 %v586
  %v1926 = vpop.f32.mrf.mxu0
  %v1927 = vadd.f32 %v1784, %v1926
  %v1928 = vpop.f32.mrf.mxu0
  %v1929 = vadd.f32 %v1786, %v1928
  %v1930 = vpop.f32.mrf.mxu0
  %v1931 = vadd.f32 %v1788, %v1930
  %v1932 = vpop.f32.mrf.mxu0
  %v1933 = vadd.f32 %v1790, %v1932
  %1934 = vmatprep.mubr.bf16.mxu0 %v596
  %1935 = vmatmul.mubr.bf16.gmra.mxu0 %v595
  %v1936 = vpop.f32.mrf.mxu0
  %v1937 = vadd.f32 %v1794, %v1936
  %v1938 = vpop.f32.mrf.mxu0
  %v1939 = vadd.f32 %v1796, %v1938
  %v1940 = vpop.f32.mrf.mxu0
  %v1941 = vadd.f32 %v1798, %v1940
  %v1942 = vpop.f32.mrf.mxu0
  %v1943 = vadd.f32 %v1800, %v1942
  %1944 = vmatprep.mubr.bf16.mxu0 %v605
  %1945 = vmatmul.mubr.bf16.gmra.mxu0 %v604
  %v1946 = vpop.f32.mrf.mxu0
  %v1947 = vadd.f32 %v1804, %v1946
  %v1948 = vpop.f32.mrf.mxu0
  %v1949 = vadd.f32 %v1806, %v1948
  %v1950 = vpop.f32.mrf.mxu0
  %v1951 = vadd.f32 %v1808, %v1950
  %v1952 = vpop.f32.mrf.mxu0
  %v1953 = vadd.f32 %v1810, %v1952
  %1954 = vmatprep.mubr.bf16.mxu0 %v614
  %1955 = vmatmul.mubr.bf16.gmra.mxu0 %v613
  %v1956 = vpop.f32.mrf.mxu0
  %v1957 = vadd.f32 %v1814, %v1956
  %v1958 = vpop.f32.mrf.mxu0
  %v1959 = vadd.f32 %v1816, %v1958
  %v1960 = vpop.f32.mrf.mxu0
  %v1961 = vadd.f32 %v1818, %v1960
  %v1962 = vpop.f32.mrf.mxu0
  %v1963 = vadd.f32 %v1820, %v1962
  %1964 = vmatprep.mubr.bf16.mxu0 %v623
  %1965 = vmatmul.mubr.bf16.gmra.mxu0 %v622
  %v1966 = vpop.f32.mrf.mxu0
  %v1967 = vadd.f32 %v1824, %v1966
  %v1968 = vpop.f32.mrf.mxu0
  %v1969 = vadd.f32 %v1826, %v1968
  %v1970 = vpop.f32.mrf.mxu0
  %v1971 = vadd.f32 %v1828, %v1970
  %v1972 = vpop.f32.mrf.mxu0
  %v1973 = vadd.f32 %v1830, %v1972
  %1974 = vmatprep.mubr.bf16.mxu0 %v632
  %1975 = vmatmul.mubr.bf16.gmra.mxu0 %v631
  %v1976 = vpop.f32.mrf.mxu0
  %v1977 = vadd.f32 %v1834, %v1976
  %v1978 = vpop.f32.mrf.mxu0
  %v1979 = vadd.f32 %v1836, %v1978
  %v1980 = vpop.f32.mrf.mxu0
  %v1981 = vadd.f32 %v1838, %v1980
  %v1982 = vpop.f32.mrf.mxu0
  %v1983 = vadd.f32 %v1840, %v1982
  %1984 = vmatprep.mubr.bf16.mxu0 %v641
  %1985 = vmatmul.mubr.bf16.gmra.mxu0 %v640
  %v1986 = vpop.f32.mrf.mxu0
  %v1987 = vadd.f32 %v1844, %v1986
  %v1988 = vpop.f32.mrf.mxu0
  %v1989 = vadd.f32 %v1846, %v1988
  %v1990 = vpop.f32.mrf.mxu0
  %v1991 = vadd.f32 %v1848, %v1990
  %v1992 = vpop.f32.mrf.mxu0
  %v1993 = vadd.f32 %v1850, %v1992
  %1994 = vmatprep.mubr.bf16.mxu0 %v650
  %1995 = vmatmul.mubr.bf16.gmra.mxu0 %v649
  %v1996 = vpop.f32.mrf.mxu0
  %v1997 = vadd.f32 %v1854, %v1996
  %v1998 = vpop.f32.mrf.mxu0
  %v1999 = vadd.f32 %v1856, %v1998
  %v2000 = vpop.f32.mrf.mxu0
  %v2001 = vadd.f32 %v1858, %v2000
  %v2002 = vpop.f32.mrf.mxu0
  %v2003 = vadd.f32 %v1860, %v2002
  %2004 = vmatprep.mubr.bf16.mxu0 %v659
  %2005 = vmatmul.mubr.bf16.gmra.mxu0 %v658
  %v2006 = vpop.f32.mrf.mxu0
  %v2007 = vadd.f32 %v1864, %v2006
  %v2008 = vpop.f32.mrf.mxu0
  %v2009 = vadd.f32 %v1866, %v2008
  %v2010 = vpop.f32.mrf.mxu0
  %v2011 = vadd.f32 %v1868, %v2010
  %v2012 = vpop.f32.mrf.mxu0
  %v2013 = vadd.f32 %v1870, %v2012
  %2014 = vdwg.mxu0
  %2015 = vmatprep.subr.bf16.mxu0 0
  %2016 = vmatpush1.bf16.msra.mxu0 0
  %2017 = vmatprep.subr.bf16.mxu0 0
  %2018 = vmatpush1.bf16.msra.mxu0 0
  %2019 = vmatprep.subr.bf16.mxu0 0
  %2020 = vmatpush1.bf16.msra.mxu0 0
  %2021 = vmatprep.subr.bf16.mxu0 0
  %2022 = vmatpush1.bf16.msra.mxu0 0
  %2023 = vmatprep.subr.bf16.mxu0 0
  %2024 = vmatpush1.bf16.msra.mxu0 0
  %2025 = vmatprep.subr.bf16.mxu0 0
  %2026 = vmatpush1.bf16.msra.mxu0 0
  %2027 = vmatprep.subr.bf16.mxu0 %v1276
  %2028 = vmatpush1.bf16.msra.mxu0 %v1275
  %2029 = vmatprep.subr.bf16.mxu0 %v1274
  %2030 = vmatpush1.bf16.msra.mxu0 %v1273
  %2031 = vmatprep.subr.bf16.mxu0 0
  %2032 = vmatpush2.bf16.msra.mxu0 0
  %2033 = vmatprep.subr.bf16.mxu0 0
  %2034 = vmatpush2.bf16.msra.mxu0 0
  %2035 = vmatprep.subr.bf16.mxu0 0
  %2036 = vmatpush2.bf16.msra.mxu0 0
  %2037 = vmatprep.subr.bf16.mxu0 0
  %2038 = vmatpush2.bf16.msra.mxu0 0
  %2039 = vmatprep.subr.bf16.mxu0 0
  %2040 = vmatpush2.bf16.msra.mxu0 0
  %2041 = vmatprep.subr.bf16.mxu0 0
  %2042 = vmatpush2.bf16.msra.mxu0 0
  %2043 = vmatprep.subr.bf16.mxu0 0
  %2044 = vmatpush2.bf16.msra.mxu0 0
  %2045 = vmatprep.subr.bf16.mxu0 0
  %2046 = vmatpush2.bf16.msra.mxu0 0
  %2047 = vmatprep.mubr.bf16.mxu0 0
  %2048 = vmatmul.mubr.bf16.gmra.mxu0 %v1411
  %v2049 = vpop.f32.mrf.mxu0
  %v2050 = vadd.f32 %v1907, %v2049
  %v2051 = vpop.f32.mrf.mxu0
  %v2052 = vadd.f32 %v1909, %v2051
  %v2053 = vpop.f32.mrf.mxu0
  %v2054 = vadd.f32 %v1911, %v2053
  %v2055 = vpop.f32.mrf.mxu0
  %v2056 = vadd.f32 %v1913, %v2055
  %2057 = vmatprep.mubr.bf16.mxu0 0
  %2058 = vmatmul.mubr.bf16.gmra.mxu0 %v1414
  %v2059 = vpop.f32.mrf.mxu0
  %v2060 = vadd.f32 %v1917, %v2059
  %v2061 = vpop.f32.mrf.mxu0
  %v2062 = vadd.f32 %v1919, %v2061
  %v2063 = vpop.f32.mrf.mxu0
  %v2064 = vadd.f32 %v1921, %v2063
  %v2065 = vpop.f32.mrf.mxu0
  %v2066 = vadd.f32 %v1923, %v2065
  %2067 = vmatprep.mubr.bf16.mxu0 0
  %2068 = vmatmul.mubr.bf16.gmra.mxu0 %v1417
  %v2069 = vpop.f32.mrf.mxu0
  %v2070 = vadd.f32 %v1927, %v2069
  %v2071 = vpop.f32.mrf.mxu0
  %v2072 = vadd.f32 %v1929, %v2071
  %v2073 = vpop.f32.mrf.mxu0
  %v2074 = vadd.f32 %v1931, %v2073
  %v2075 = vpop.f32.mrf.mxu0
  %v2076 = vadd.f32 %v1933, %v2075
  %2077 = vmatprep.mubr.bf16.mxu0 0
  %2078 = vmatmul.mubr.bf16.gmra.mxu0 %v1420
  %v2079 = vpop.f32.mrf.mxu0
  %v2080 = vadd.f32 %v1937, %v2079
  %v2081 = vpop.f32.mrf.mxu0
  %v2082 = vadd.f32 %v1939, %v2081
  %v2083 = vpop.f32.mrf.mxu0
  %v2084 = vadd.f32 %v1941, %v2083
  %v2085 = vpop.f32.mrf.mxu0
  %v2086 = vadd.f32 %v1943, %v2085
  %2087 = vmatprep.mubr.bf16.mxu0 0
  %2088 = vmatmul.mubr.bf16.gmra.mxu0 %v1423
  %v2089 = vpop.f32.mrf.mxu0
  %v2090 = vadd.f32 %v1947, %v2089
  %v2091 = vpop.f32.mrf.mxu0
  %v2092 = vadd.f32 %v1949, %v2091
  %v2093 = vpop.f32.mrf.mxu0
  %v2094 = vadd.f32 %v1951, %v2093
  %v2095 = vpop.f32.mrf.mxu0
  %v2096 = vadd.f32 %v1953, %v2095
  %2097 = vmatprep.mubr.bf16.mxu0 0
  %2098 = vmatmul.mubr.bf16.gmra.mxu0 %v1426
  %v2099 = vpop.f32.mrf.mxu0
  %v2100 = vadd.f32 %v1957, %v2099
  %v2101 = vpop.f32.mrf.mxu0
  %v2102 = vadd.f32 %v1959, %v2101
  %v2103 = vpop.f32.mrf.mxu0
  %v2104 = vadd.f32 %v1961, %v2103
  %v2105 = vpop.f32.mrf.mxu0
  %v2106 = vadd.f32 %v1963, %v2105
  %2107 = vmatprep.mubr.bf16.mxu0 0
  %2108 = vmatmul.mubr.bf16.gmra.mxu0 %v1429
  %v2109 = vpop.f32.mrf.mxu0
  %v2110 = vadd.f32 %v1967, %v2109
  %v2111 = vpop.f32.mrf.mxu0
  %v2112 = vadd.f32 %v1969, %v2111
  %v2113 = vpop.f32.mrf.mxu0
  %v2114 = vadd.f32 %v1971, %v2113
  %v2115 = vpop.f32.mrf.mxu0
  %v2116 = vadd.f32 %v1973, %v2115
  %2117 = vmatprep.mubr.bf16.mxu0 0
  %2118 = vmatmul.mubr.bf16.gmra.mxu0 %v1432
  %v2119 = vpop.f32.mrf.mxu0
  %v2120 = vadd.f32 %v1977, %v2119
  %v2121 = vpop.f32.mrf.mxu0
  %v2122 = vadd.f32 %v1979, %v2121
  %v2123 = vpop.f32.mrf.mxu0
  %v2124 = vadd.f32 %v1981, %v2123
  %v2125 = vpop.f32.mrf.mxu0
  %v2126 = vadd.f32 %v1983, %v2125
  %2127 = vmatprep.mubr.bf16.mxu0 0
  %2128 = vmatmul.mubr.bf16.gmra.mxu0 %v1435
  %v2129 = vpop.f32.mrf.mxu0
  %v2130 = vadd.f32 %v1987, %v2129
  %v2131 = vpop.f32.mrf.mxu0
  %v2132 = vadd.f32 %v1989, %v2131
  %v2133 = vpop.f32.mrf.mxu0
  %v2134 = vadd.f32 %v1991, %v2133
  %v2135 = vpop.f32.mrf.mxu0
  %v2136 = vadd.f32 %v1993, %v2135
  %2137 = vmatprep.mubr.bf16.mxu0 0
  %2138 = vmatmul.mubr.bf16.gmra.mxu0 %v1438
  %v2139 = vpop.f32.mrf.mxu0
  %v2140 = vadd.f32 %v1997, %v2139
  %v2141 = vpop.f32.mrf.mxu0
  %v2142 = vadd.f32 %v1999, %v2141
  %v2143 = vpop.f32.mrf.mxu0
  %v2144 = vadd.f32 %v2001, %v2143
  %v2145 = vpop.f32.mrf.mxu0
  %v2146 = vadd.f32 %v2003, %v2145
  %2147 = vmatprep.mubr.bf16.mxu0 0
  %2148 = vmatmul.mubr.bf16.gmra.mxu0 %v1441
  %v2149 = vpop.f32.mrf.mxu0
  %v2150 = vadd.f32 %v2007, %v2149
  %v2151 = vpop.f32.mrf.mxu0
  %v2152 = vadd.f32 %v2009, %v2151
  %v2153 = vpop.f32.mrf.mxu0
  %v2154 = vadd.f32 %v2011, %v2153
  %v2155 = vpop.f32.mrf.mxu0
  %v2156 = vadd.f32 %v2013, %v2155
  %2157 = vdwg.mxu0
  %2158 = vst [vmem:[%s2] sm:$0xff] %v2050
  %vm2159 = vcmask 556032
  %2160 = vst.msk [vmem:[%s2 + $0x8] sm:$0xff] %vm2159, %v2052
  %2161 = vst [vmem:[%s2 + $0x10] sm:$0xff] %v2054
  %2162 = vst.msk [vmem:[%s2 + $0x18] sm:$0xff] %vm2159, %v2056
  %2163 = vst [vmem:[%s2 + $0x20] sm:$0xff] %v2060
  %2164 = vst.msk [vmem:[%s2 + $0x28] sm:$0xff] %vm2159, %v2062
  %2165 = vst [vmem:[%s2 + $0x30] sm:$0xff] %v2064
  %2166 = vst.msk [vmem:[%s2 + $0x38] sm:$0xff] %vm2159, %v2066
  %2167 = vst [vmem:[%s2 + $0x40] sm:$0xff] %v2070
  %2168 = vst.msk [vmem:[%s2 + $0x48] sm:$0xff] %vm2159, %v2072
  %2169 = vst [vmem:[%s2 + $0x50] sm:$0xff] %v2074
  %2170 = vst.msk [vmem:[%s2 + $0x58] sm:$0xff] %vm2159, %v2076
  %2171 = vst [vmem:[%s2 + $0x60] sm:$0xff] %v2080
  %2172 = vst.msk [vmem:[%s2 + $0x68] sm:$0xff] %vm2159, %v2082
  %2173 = vst [vmem:[%s2 + $0x70] sm:$0xff] %v2084
  %2174 = vst.msk [vmem:[%s2 + $0x78] sm:$0xff] %vm2159, %v2086
  %2175 = vst [vmem:[%s2 + $0x80] sm:$0xff] %v2090
  %2176 = vst.msk [vmem:[%s2 + $0x88] sm:$0xff] %vm2159, %v2092
  %2177 = vst [vmem:[%s2 + $0x90] sm:$0xff] %v2094
  %2178 = vst.msk [vmem:[%s2 + $0x98] sm:$0xff] %vm2159, %v2096
  %2179 = vst [vmem:[%s2 + $0xa0] sm:$0xff] %v2100
  %2180 = vst.msk [vmem:[%s2 + $0xa8] sm:$0xff] %vm2159, %v2102
  %2181 = vst [vmem:[%s2 + $0xb0] sm:$0xff] %v2104
  %2182 = vst.msk [vmem:[%s2 + $0xb8] sm:$0xff] %vm2159, %v2106
  %2183 = vst [vmem:[%s2 + $0xc0] sm:$0xff] %v2110
  %2184 = vst.msk [vmem:[%s2 + $0xc8] sm:$0xff] %vm2159, %v2112
  %2185 = vst [vmem:[%s2 + $0xd0] sm:$0xff] %v2114
  %2186 = vst.msk [vmem:[%s2 + $0xd8] sm:$0xff] %vm2159, %v2116
  %2187 = vst [vmem:[%s2 + $0xe0] sm:$0xff] %v2120
  %2188 = vst.msk [vmem:[%s2 + $0xe8] sm:$0xff] %vm2159, %v2122
  %2189 = vst [vmem:[%s2 + $0xf0] sm:$0xff] %v2124
  %2190 = vst.msk [vmem:[%s2 + $0xf8] sm:$0xff] %vm2159, %v2126
  %2191 = vst [vmem:[%s2 + $0x100] sm:$0xff] %v2130
  %2192 = vst.msk [vmem:[%s2 + $0x108] sm:$0xff] %vm2159, %v2132
  %2193 = vst [vmem:[%s2 + $0x110] sm:$0xff] %v2134
  %2194 = vst.msk [vmem:[%s2 + $0x118] sm:$0xff] %vm2159, %v2136
  %2195 = vst [vmem:[%s2 + $0x120] sm:$0xff] %v2140
  %2196 = vst.msk [vmem:[%s2 + $0x128] sm:$0xff] %vm2159, %v2142
  %2197 = vst [vmem:[%s2 + $0x130] sm:$0xff] %v2144
  %2198 = vst.msk [vmem:[%s2 + $0x138] sm:$0xff] %vm2159, %v2146
  %2199 = vst [vmem:[%s2 + $0x140] sm:$0xff] %v2150
  %2200 = vst.msk [vmem:[%s2 + $0x148] sm:$0xff] %vm2159, %v2152
  %2201 = vst [vmem:[%s2 + $0x150] sm:$0xff] %v2154
  %2202 = vst.msk [vmem:[%s2 + $0x158] sm:$0xff] %vm2159, %v2156
  // Predicated region
  $region10: #{conv2d_1x1.1} parent=0 // pred_check
    _
  $region11: #{conv2d_1x1.1} parent=0 // pred_check_branch
    %2204 = sbr.rel (0) target = $region13
  $region12: #{conv2d_1x1.1} parent=0 // pred_region
    _
  $region13: #{conv2d_1x1.1} parent=0 // pred_fallthru
    _
  // Predicated region
  $region14: #{conv2d_1x1.1} parent=0 // pred_check
    _
  $region15: #{conv2d_1x1.1} parent=0 // pred_check_branch
    %2206 = sbr.rel (0) target = $region17
  $region16: #{conv2d_1x1.1} parent=0 // pred_region
    _
  $region17: #{conv2d_1x1.1} parent=0 // pred_fallthru
    _

</llo_original>
